<compile_context>
chip_gen: v7x
topology: tpu7x:2x2x1
jax: 0.10.0
libtpu: 0.0.40
codegen_flags: <defaults>
</compile_context>

<pallas_src>
import functools

import jax
import jax.numpy as jnp
from jax.experimental import pallas as pl
from jax.experimental.pallas import tpu as pltpu

BN_EPS = 1e-5
PAD = 128          # all feature dims padded to 128 lanes
N_LAYERS = 10


def _baseline_kernel(x_ref, w_hbm, aff_ref, out_ref, w_vmem, sem, *, d_in):
    """x_ref: (B, d_in) f32 VMEM; w_hbm: (10, 128, 128) bf16 HBM;
    aff_ref: (19, 128) f32 VMEM [gamma(0..8) | beta(9..17) | fc10 bias(18)];
    out_ref: (B, 128) f32 VMEM; w_vmem: (10, 128, 128) bf16 scratch;
    sem: (10,) DMA semaphores."""
    # Fire all per-layer weight DMAs up front; wait on each slab only right
    # before its layer needs it so the transfer hides under earlier compute.
    copies = [pltpu.make_async_copy(w_hbm.at[i], w_vmem.at[i], sem.at[i])
              for i in range(N_LAYERS)]
    for cp in copies:
        cp.start()

    # Hoist the whole affine table into registers once (~3 vregs).
    aff = aff_ref[...]                                        # (19, 128) f32

    h = x_ref[...]                                            # (B, d_in) f32

    # Layers 1..9: Linear (no bias; training-mode BN cancels it) -> BN -> ReLU.
    for i in range(9):
        copies[i].wait()
        if i == 0:
            w = w_vmem[0, :d_in, :]                           # (d_in, 128)
        else:
            w = w_vmem[i]                                     # (128, 128)
        y = jnp.dot(h.astype(jnp.bfloat16), w,
                    preferred_element_type=jnp.float32)       # (B, 128) f32
        mean = jnp.mean(y, axis=0, keepdims=True)             # (1, 128)
        mean_sq = jnp.mean(y * y, axis=0, keepdims=True)      # (1, 128)
        var = jnp.maximum(mean_sq - mean * mean, 0.0)         # clamp for safety
        gamma = aff[i:i + 1, :]                               # (1, 128)
        beta = aff[9 + i:10 + i, :]                           # (1, 128)
        scale = gamma * jax.lax.rsqrt(var + BN_EPS)           # EUP rsqrt
        shift = beta - mean * scale
        h = jnp.maximum(y * scale + shift, 0.0)

    # Layer 10: Linear with bias (no BN), output left lane-dense (B, 128).
    copies[9].wait()
    y = jnp.dot(h.astype(jnp.bfloat16), w_vmem[9],
                preferred_element_type=jnp.float32)
    out_ref[...] = y + aff[18:19, :]


@jax.jit
def baseline_forward(x, w_slab, aff):
    """x: (B, D) f32. w_slab: (10,128,128) bf16. aff: (19,128) f32. Returns (B, D)."""
    B, D = x.shape
    vmem = pl.BlockSpec(memory_space=pltpu.MemorySpace.VMEM)
    out_pad = pl.pallas_call(
        functools.partial(_baseline_kernel, d_in=D),
        out_shape=jax.ShapeDtypeStruct((B, PAD), jnp.float32),
        in_specs=[vmem,                                   # x (tiny, auto-DMA)
                  pl.BlockSpec(memory_space=pl.ANY),      # weight slab in HBM
                  vmem],                                  # affine table
        out_specs=vmem,
        scratch_shapes=[pltpu.VMEM((N_LAYERS, PAD, PAD), jnp.bfloat16),
                        pltpu.SemaphoreType.DMA((N_LAYERS,))],
    )(x, w_slab, aff)
    return out_pad[:, :D]


def layer_dims(input_dims):
    return [
        (input_dims, 128), (128, 128), (128, 128), (128, 128), (128, 8),
        (8, 128), (128, 128), (128, 128), (128, 128), (128, input_dims),
    ]


def make_params(input_dims, key):
    """Flat param list matching the PyTorch module:
    layers 1..9 -> (W (in,out), b (1,out), gamma (1,out), beta (1,out));
    layer 10 -> (W, b)."""
    params = []
    for li, (din, dout) in enumerate(layer_dims(input_dims)):
        key, kw, kb = jax.random.split(key, 3)
        bound = 1.0 / jnp.sqrt(jnp.float32(din))
        w = jax.random.uniform(kw, (din, dout), jnp.float32, -bound, bound)
        b = jax.random.uniform(kb, (1, dout), jnp.float32, -bound, bound)
        params.extend([w, b])
        if li < 9:
            params.extend([jnp.ones((1, dout), jnp.float32),
                           jnp.zeros((1, dout), jnp.float32)])
    return params


def pack_params(params_flat):
    """Pack the flat param list into the two kernel inputs (done once, offline).
    Zero-fill invariant: padded rows/cols of W and padded lanes of gamma/beta
    are zero so dead lanes stay zero through BN + ReLU."""
    w_slab = jnp.zeros((N_LAYERS, PAD, PAD), jnp.float32)
    aff = jnp.zeros((19, PAD), jnp.float32)
    idx = 0
    for li in range(N_LAYERS):
        if li < 9:
            w, _b, g, be = params_flat[idx:idx + 4]
            idx += 4
        else:
            w, b10 = params_flat[idx:idx + 2]
            idx += 2
        din, dout = w.shape
        w_slab = w_slab.at[li, :din, :dout].set(w)
        if li < 9:
            aff = aff.at[li, :dout].set(g.reshape(-1))
            aff = aff.at[9 + li, :dout].set(be.reshape(-1))
        else:
            aff = aff.at[18, :dout].set(b10.reshape(-1))
    return w_slab.astype(jnp.bfloat16), aff


def reference_forward(x, params_flat):
    """Spec-faithful reference (biases, centered variance, unfused affine);
    matmul operands cast to bf16 to match the kernel's MXU precision."""
    h = x
    idx = 0
    for _ in range(9):
        w, b, g, be = params_flat[idx:idx + 4]
        idx += 4
        y = jnp.dot(h.astype(jnp.bfloat16), w.astype(jnp.bfloat16),
                    preferred_element_type=jnp.float32) + b
        mean = jnp.mean(y, axis=0, keepdims=True)
        var = jnp.mean(jnp.square(y - mean), axis=0, keepdims=True)
        h = jnp.maximum((y - mean) / jnp.sqrt(var + BN_EPS) * g + be, 0.0)
    w, b = params_flat[idx:idx + 2]
    return jnp.dot(h.astype(jnp.bfloat16), w.astype(jnp.bfloat16),
                   preferred_element_type=jnp.float32) + b


if __name__ == "__main__":
    INPUT_DIMS = 32
    BATCH = 8

    key = jax.random.PRNGKey(0)
    kx, kp = jax.random.split(key)
    x = jax.random.normal(kx, (BATCH, INPUT_DIMS), dtype=jnp.float32)
    params = make_params(INPUT_DIMS, kp)
    w_slab, aff = pack_params(params)

    out = baseline_forward(x, w_slab, aff)
    out = jax.block_until_ready(out)

    ref = reference_forward(x, params)
    assert out.shape == (BATCH, INPUT_DIMS)
    assert jnp.allclose(out, ref, atol=1e-2, rtol=1e-2), "mismatch vs reference"

    print("KERNEL_OK")
</pallas_src>

<mosaic_0001>
module attributes {stable_mosaic.version = 11 : i64} {
  func.func @_baseline_kernel(%arg0: memref<8x32xf32, #tpu.memory_space<vmem>>, %arg1: memref<10x128x128xbf16, #tpu.memory_space<any>>, %arg2: memref<19x128xf32, #tpu.memory_space<vmem>>, %arg3: memref<8x128xf32, #tpu.memory_space<vmem>>, %arg4: memref<10x128x128xbf16, #tpu.memory_space<vmem>>, %arg5: memref<10x!tpu.dma_semaphore, #tpu.memory_space<semaphore_mem>>) attributes {dimension_semantics = [], scalar_prefetch = 0 : i64, scratch_operands = 2 : i64, tpu.core_type = #tpu.core_type<tc>} {
    %c0_i32 = arith.constant 0 : i32
    %c0_i32_0 = arith.constant 0 : i32
    %c0_i32_1 = arith.constant 0 : i32
    %c0_i32_2 = arith.constant 0 : i32
    %c0_i32_3 = arith.constant 0 : i32
    %0 = tpu.memref_slice %arg1[%c0_i32, %c0_i32_2, %c0_i32_3] : memref<10x128x128xbf16, #tpu.memory_space<any>> -> memref<1x128x128xbf16, #tpu.memory_space<any>>
    %1 = tpu.memref_squeeze %0 : memref<1x128x128xbf16, #tpu.memory_space<any>> -> memref<128x128xbf16, #tpu.memory_space<any>>
    %c0_i32_4 = arith.constant 0 : i32
    %c0_i32_5 = arith.constant 0 : i32
    %2 = tpu.memref_slice %arg4[%c0_i32_0, %c0_i32_4, %c0_i32_5] : memref<10x128x128xbf16, #tpu.memory_space<vmem>> -> memref<1x128x128xbf16, #tpu.memory_space<vmem>>
    %3 = tpu.memref_squeeze %2 : memref<1x128x128xbf16, #tpu.memory_space<vmem>> -> memref<128x128xbf16, #tpu.memory_space<vmem>>
    %4 = tpu.memref_slice %arg5[%c0_i32_1] : memref<10x!tpu.dma_semaphore, #tpu.memory_space<semaphore_mem>> -> memref<1x!tpu.dma_semaphore, #tpu.memory_space<semaphore_mem>>
    %5 = tpu.memref_squeeze %4 : memref<1x!tpu.dma_semaphore, #tpu.memory_space<semaphore_mem>> -> memref<!tpu.dma_semaphore, #tpu.memory_space<semaphore_mem>>
    tpu.enqueue_dma source(%1 : memref<128x128xbf16, #tpu.memory_space<any>>) target(%3 : memref<128x128xbf16, #tpu.memory_space<vmem>>) target_semaphore(%5 : memref<!tpu.dma_semaphore, #tpu.memory_space<semaphore_mem>>)
    %c1_i32 = arith.constant 1 : i32
    %c1_i32_6 = arith.constant 1 : i32
    %c1_i32_7 = arith.constant 1 : i32
    %c0_i32_8 = arith.constant 0 : i32
    %c0_i32_9 = arith.constant 0 : i32
    %6 = tpu.memref_slice %arg1[%c1_i32, %c0_i32_8, %c0_i32_9] : memref<10x128x128xbf16, #tpu.memory_space<any>> -> memref<1x128x128xbf16, #tpu.memory_space<any>>
    %7 = tpu.memref_squeeze %6 : memref<1x128x128xbf16, #tpu.memory_space<any>> -> memref<128x128xbf16, #tpu.memory_space<any>>
    %c0_i32_10 = arith.constant 0 : i32
    %c0_i32_11 = arith.constant 0 : i32
    %8 = tpu.memref_slice %arg4[%c1_i32_6, %c0_i32_10, %c0_i32_11] : memref<10x128x128xbf16, #tpu.memory_space<vmem>> -> memref<1x128x128xbf16, #tpu.memory_space<vmem>>
    %9 = tpu.memref_squeeze %8 : memref<1x128x128xbf16, #tpu.memory_space<vmem>> -> memref<128x128xbf16, #tpu.memory_space<vmem>>
    %10 = tpu.memref_slice %arg5[%c1_i32_7] : memref<10x!tpu.dma_semaphore, #tpu.memory_space<semaphore_mem>> -> memref<1x!tpu.dma_semaphore, #tpu.memory_space<semaphore_mem>>
    %11 = tpu.memref_squeeze %10 : memref<1x!tpu.dma_semaphore, #tpu.memory_space<semaphore_mem>> -> memref<!tpu.dma_semaphore, #tpu.memory_space<semaphore_mem>>
    tpu.enqueue_dma source(%7 : memref<128x128xbf16, #tpu.memory_space<any>>) target(%9 : memref<128x128xbf16, #tpu.memory_space<vmem>>) target_semaphore(%11 : memref<!tpu.dma_semaphore, #tpu.memory_space<semaphore_mem>>)
    %c2_i32 = arith.constant 2 : i32
    %c2_i32_12 = arith.constant 2 : i32
    %c2_i32_13 = arith.constant 2 : i32
    %c0_i32_14 = arith.constant 0 : i32
    %c0_i32_15 = arith.constant 0 : i32
    %12 = tpu.memref_slice %arg1[%c2_i32, %c0_i32_14, %c0_i32_15] : memref<10x128x128xbf16, #tpu.memory_space<any>> -> memref<1x128x128xbf16, #tpu.memory_space<any>>
    %13 = tpu.memref_squeeze %12 : memref<1x128x128xbf16, #tpu.memory_space<any>> -> memref<128x128xbf16, #tpu.memory_space<any>>
    %c0_i32_16 = arith.constant 0 : i32
    %c0_i32_17 = arith.constant 0 : i32
    %14 = tpu.memref_slice %arg4[%c2_i32_12, %c0_i32_16, %c0_i32_17] : memref<10x128x128xbf16, #tpu.memory_space<vmem>> -> memref<1x128x128xbf16, #tpu.memory_space<vmem>>
    %15 = tpu.memref_squeeze %14 : memref<1x128x128xbf16, #tpu.memory_space<vmem>> -> memref<128x128xbf16, #tpu.memory_space<vmem>>
    %16 = tpu.memref_slice %arg5[%c2_i32_13] : memref<10x!tpu.dma_semaphore, #tpu.memory_space<semaphore_mem>> -> memref<1x!tpu.dma_semaphore, #tpu.memory_space<semaphore_mem>>
    %17 = tpu.memref_squeeze %16 : memref<1x!tpu.dma_semaphore, #tpu.memory_space<semaphore_mem>> -> memref<!tpu.dma_semaphore, #tpu.memory_space<semaphore_mem>>
    tpu.enqueue_dma source(%13 : memref<128x128xbf16, #tpu.memory_space<any>>) target(%15 : memref<128x128xbf16, #tpu.memory_space<vmem>>) target_semaphore(%17 : memref<!tpu.dma_semaphore, #tpu.memory_space<semaphore_mem>>)
    %c3_i32 = arith.constant 3 : i32
    %c3_i32_18 = arith.constant 3 : i32
    %c3_i32_19 = arith.constant 3 : i32
    %c0_i32_20 = arith.constant 0 : i32
    %c0_i32_21 = arith.constant 0 : i32
    %18 = tpu.memref_slice %arg1[%c3_i32, %c0_i32_20, %c0_i32_21] : memref<10x128x128xbf16, #tpu.memory_space<any>> -> memref<1x128x128xbf16, #tpu.memory_space<any>>
    %19 = tpu.memref_squeeze %18 : memref<1x128x128xbf16, #tpu.memory_space<any>> -> memref<128x128xbf16, #tpu.memory_space<any>>
    %c0_i32_22 = arith.constant 0 : i32
    %c0_i32_23 = arith.constant 0 : i32
    %20 = tpu.memref_slice %arg4[%c3_i32_18, %c0_i32_22, %c0_i32_23] : memref<10x128x128xbf16, #tpu.memory_space<vmem>> -> memref<1x128x128xbf16, #tpu.memory_space<vmem>>
    %21 = tpu.memref_squeeze %20 : memref<1x128x128xbf16, #tpu.memory_space<vmem>> -> memref<128x128xbf16, #tpu.memory_space<vmem>>
    %22 = tpu.memref_slice %arg5[%c3_i32_19] : memref<10x!tpu.dma_semaphore, #tpu.memory_space<semaphore_mem>> -> memref<1x!tpu.dma_semaphore, #tpu.memory_space<semaphore_mem>>
    %23 = tpu.memref_squeeze %22 : memref<1x!tpu.dma_semaphore, #tpu.memory_space<semaphore_mem>> -> memref<!tpu.dma_semaphore, #tpu.memory_space<semaphore_mem>>
    tpu.enqueue_dma source(%19 : memref<128x128xbf16, #tpu.memory_space<any>>) target(%21 : memref<128x128xbf16, #tpu.memory_space<vmem>>) target_semaphore(%23 : memref<!tpu.dma_semaphore, #tpu.memory_space<semaphore_mem>>)
    %c4_i32 = arith.constant 4 : i32
    %c4_i32_24 = arith.constant 4 : i32
    %c4_i32_25 = arith.constant 4 : i32
    %c0_i32_26 = arith.constant 0 : i32
    %c0_i32_27 = arith.constant 0 : i32
    %24 = tpu.memref_slice %arg1[%c4_i32, %c0_i32_26, %c0_i32_27] : memref<10x128x128xbf16, #tpu.memory_space<any>> -> memref<1x128x128xbf16, #tpu.memory_space<any>>
    %25 = tpu.memref_squeeze %24 : memref<1x128x128xbf16, #tpu.memory_space<any>> -> memref<128x128xbf16, #tpu.memory_space<any>>
    %c0_i32_28 = arith.constant 0 : i32
    %c0_i32_29 = arith.constant 0 : i32
    %26 = tpu.memref_slice %arg4[%c4_i32_24, %c0_i32_28, %c0_i32_29] : memref<10x128x128xbf16, #tpu.memory_space<vmem>> -> memref<1x128x128xbf16, #tpu.memory_space<vmem>>
    %27 = tpu.memref_squeeze %26 : memref<1x128x128xbf16, #tpu.memory_space<vmem>> -> memref<128x128xbf16, #tpu.memory_space<vmem>>
    %28 = tpu.memref_slice %arg5[%c4_i32_25] : memref<10x!tpu.dma_semaphore, #tpu.memory_space<semaphore_mem>> -> memref<1x!tpu.dma_semaphore, #tpu.memory_space<semaphore_mem>>
    %29 = tpu.memref_squeeze %28 : memref<1x!tpu.dma_semaphore, #tpu.memory_space<semaphore_mem>> -> memref<!tpu.dma_semaphore, #tpu.memory_space<semaphore_mem>>
    tpu.enqueue_dma source(%25 : memref<128x128xbf16, #tpu.memory_space<any>>) target(%27 : memref<128x128xbf16, #tpu.memory_space<vmem>>) target_semaphore(%29 : memref<!tpu.dma_semaphore, #tpu.memory_space<semaphore_mem>>)
    %c5_i32 = arith.constant 5 : i32
    %c5_i32_30 = arith.constant 5 : i32
    %c5_i32_31 = arith.constant 5 : i32
    %c0_i32_32 = arith.constant 0 : i32
    %c0_i32_33 = arith.constant 0 : i32
    %30 = tpu.memref_slice %arg1[%c5_i32, %c0_i32_32, %c0_i32_33] : memref<10x128x128xbf16, #tpu.memory_space<any>> -> memref<1x128x128xbf16, #tpu.memory_space<any>>
    %31 = tpu.memref_squeeze %30 : memref<1x128x128xbf16, #tpu.memory_space<any>> -> memref<128x128xbf16, #tpu.memory_space<any>>
    %c0_i32_34 = arith.constant 0 : i32
    %c0_i32_35 = arith.constant 0 : i32
    %32 = tpu.memref_slice %arg4[%c5_i32_30, %c0_i32_34, %c0_i32_35] : memref<10x128x128xbf16, #tpu.memory_space<vmem>> -> memref<1x128x128xbf16, #tpu.memory_space<vmem>>
    %33 = tpu.memref_squeeze %32 : memref<1x128x128xbf16, #tpu.memory_space<vmem>> -> memref<128x128xbf16, #tpu.memory_space<vmem>>
    %34 = tpu.memref_slice %arg5[%c5_i32_31] : memref<10x!tpu.dma_semaphore, #tpu.memory_space<semaphore_mem>> -> memref<1x!tpu.dma_semaphore, #tpu.memory_space<semaphore_mem>>
    %35 = tpu.memref_squeeze %34 : memref<1x!tpu.dma_semaphore, #tpu.memory_space<semaphore_mem>> -> memref<!tpu.dma_semaphore, #tpu.memory_space<semaphore_mem>>
    tpu.enqueue_dma source(%31 : memref<128x128xbf16, #tpu.memory_space<any>>) target(%33 : memref<128x128xbf16, #tpu.memory_space<vmem>>) target_semaphore(%35 : memref<!tpu.dma_semaphore, #tpu.memory_space<semaphore_mem>>)
    %c6_i32 = arith.constant 6 : i32
    %c6_i32_36 = arith.constant 6 : i32
    %c6_i32_37 = arith.constant 6 : i32
    %c0_i32_38 = arith.constant 0 : i32
    %c0_i32_39 = arith.constant 0 : i32
    %36 = tpu.memref_slice %arg1[%c6_i32, %c0_i32_38, %c0_i32_39] : memref<10x128x128xbf16, #tpu.memory_space<any>> -> memref<1x128x128xbf16, #tpu.memory_space<any>>
    %37 = tpu.memref_squeeze %36 : memref<1x128x128xbf16, #tpu.memory_space<any>> -> memref<128x128xbf16, #tpu.memory_space<any>>
    %c0_i32_40 = arith.constant 0 : i32
    %c0_i32_41 = arith.constant 0 : i32
    %38 = tpu.memref_slice %arg4[%c6_i32_36, %c0_i32_40, %c0_i32_41] : memref<10x128x128xbf16, #tpu.memory_space<vmem>> -> memref<1x128x128xbf16, #tpu.memory_space<vmem>>
    %39 = tpu.memref_squeeze %38 : memref<1x128x128xbf16, #tpu.memory_space<vmem>> -> memref<128x128xbf16, #tpu.memory_space<vmem>>
    %40 = tpu.memref_slice %arg5[%c6_i32_37] : memref<10x!tpu.dma_semaphore, #tpu.memory_space<semaphore_mem>> -> memref<1x!tpu.dma_semaphore, #tpu.memory_space<semaphore_mem>>
    %41 = tpu.memref_squeeze %40 : memref<1x!tpu.dma_semaphore, #tpu.memory_space<semaphore_mem>> -> memref<!tpu.dma_semaphore, #tpu.memory_space<semaphore_mem>>
    tpu.enqueue_dma source(%37 : memref<128x128xbf16, #tpu.memory_space<any>>) target(%39 : memref<128x128xbf16, #tpu.memory_space<vmem>>) target_semaphore(%41 : memref<!tpu.dma_semaphore, #tpu.memory_space<semaphore_mem>>)
    %c7_i32 = arith.constant 7 : i32
    %c7_i32_42 = arith.constant 7 : i32
    %c7_i32_43 = arith.constant 7 : i32
    %c0_i32_44 = arith.constant 0 : i32
    %c0_i32_45 = arith.constant 0 : i32
    %42 = tpu.memref_slice %arg1[%c7_i32, %c0_i32_44, %c0_i32_45] : memref<10x128x128xbf16, #tpu.memory_space<any>> -> memref<1x128x128xbf16, #tpu.memory_space<any>>
    %43 = tpu.memref_squeeze %42 : memref<1x128x128xbf16, #tpu.memory_space<any>> -> memref<128x128xbf16, #tpu.memory_space<any>>
    %c0_i32_46 = arith.constant 0 : i32
    %c0_i32_47 = arith.constant 0 : i32
    %44 = tpu.memref_slice %arg4[%c7_i32_42, %c0_i32_46, %c0_i32_47] : memref<10x128x128xbf16, #tpu.memory_space<vmem>> -> memref<1x128x128xbf16, #tpu.memory_space<vmem>>
    %45 = tpu.memref_squeeze %44 : memref<1x128x128xbf16, #tpu.memory_space<vmem>> -> memref<128x128xbf16, #tpu.memory_space<vmem>>
    %46 = tpu.memref_slice %arg5[%c7_i32_43] : memref<10x!tpu.dma_semaphore, #tpu.memory_space<semaphore_mem>> -> memref<1x!tpu.dma_semaphore, #tpu.memory_space<semaphore_mem>>
    %47 = tpu.memref_squeeze %46 : memref<1x!tpu.dma_semaphore, #tpu.memory_space<semaphore_mem>> -> memref<!tpu.dma_semaphore, #tpu.memory_space<semaphore_mem>>
    tpu.enqueue_dma source(%43 : memref<128x128xbf16, #tpu.memory_space<any>>) target(%45 : memref<128x128xbf16, #tpu.memory_space<vmem>>) target_semaphore(%47 : memref<!tpu.dma_semaphore, #tpu.memory_space<semaphore_mem>>)
    %c8_i32 = arith.constant 8 : i32
    %c8_i32_48 = arith.constant 8 : i32
    %c8_i32_49 = arith.constant 8 : i32
    %c0_i32_50 = arith.constant 0 : i32
    %c0_i32_51 = arith.constant 0 : i32
    %48 = tpu.memref_slice %arg1[%c8_i32, %c0_i32_50, %c0_i32_51] : memref<10x128x128xbf16, #tpu.memory_space<any>> -> memref<1x128x128xbf16, #tpu.memory_space<any>>
    %49 = tpu.memref_squeeze %48 : memref<1x128x128xbf16, #tpu.memory_space<any>> -> memref<128x128xbf16, #tpu.memory_space<any>>
    %c0_i32_52 = arith.constant 0 : i32
    %c0_i32_53 = arith.constant 0 : i32
    %50 = tpu.memref_slice %arg4[%c8_i32_48, %c0_i32_52, %c0_i32_53] : memref<10x128x128xbf16, #tpu.memory_space<vmem>> -> memref<1x128x128xbf16, #tpu.memory_space<vmem>>
    %51 = tpu.memref_squeeze %50 : memref<1x128x128xbf16, #tpu.memory_space<vmem>> -> memref<128x128xbf16, #tpu.memory_space<vmem>>
    %52 = tpu.memref_slice %arg5[%c8_i32_49] : memref<10x!tpu.dma_semaphore, #tpu.memory_space<semaphore_mem>> -> memref<1x!tpu.dma_semaphore, #tpu.memory_space<semaphore_mem>>
    %53 = tpu.memref_squeeze %52 : memref<1x!tpu.dma_semaphore, #tpu.memory_space<semaphore_mem>> -> memref<!tpu.dma_semaphore, #tpu.memory_space<semaphore_mem>>
    tpu.enqueue_dma source(%49 : memref<128x128xbf16, #tpu.memory_space<any>>) target(%51 : memref<128x128xbf16, #tpu.memory_space<vmem>>) target_semaphore(%53 : memref<!tpu.dma_semaphore, #tpu.memory_space<semaphore_mem>>)
    %c9_i32 = arith.constant 9 : i32
    %c9_i32_54 = arith.constant 9 : i32
    %c9_i32_55 = arith.constant 9 : i32
    %c0_i32_56 = arith.constant 0 : i32
    %c0_i32_57 = arith.constant 0 : i32
    %54 = tpu.memref_slice %arg1[%c9_i32, %c0_i32_56, %c0_i32_57] : memref<10x128x128xbf16, #tpu.memory_space<any>> -> memref<1x128x128xbf16, #tpu.memory_space<any>>
    %55 = tpu.memref_squeeze %54 : memref<1x128x128xbf16, #tpu.memory_space<any>> -> memref<128x128xbf16, #tpu.memory_space<any>>
    %c0_i32_58 = arith.constant 0 : i32
    %c0_i32_59 = arith.constant 0 : i32
    %56 = tpu.memref_slice %arg4[%c9_i32_54, %c0_i32_58, %c0_i32_59] : memref<10x128x128xbf16, #tpu.memory_space<vmem>> -> memref<1x128x128xbf16, #tpu.memory_space<vmem>>
    %57 = tpu.memref_squeeze %56 : memref<1x128x128xbf16, #tpu.memory_space<vmem>> -> memref<128x128xbf16, #tpu.memory_space<vmem>>
    %58 = tpu.memref_slice %arg5[%c9_i32_55] : memref<10x!tpu.dma_semaphore, #tpu.memory_space<semaphore_mem>> -> memref<1x!tpu.dma_semaphore, #tpu.memory_space<semaphore_mem>>
    %59 = tpu.memref_squeeze %58 : memref<1x!tpu.dma_semaphore, #tpu.memory_space<semaphore_mem>> -> memref<!tpu.dma_semaphore, #tpu.memory_space<semaphore_mem>>
    tpu.enqueue_dma source(%55 : memref<128x128xbf16, #tpu.memory_space<any>>) target(%57 : memref<128x128xbf16, #tpu.memory_space<vmem>>) target_semaphore(%59 : memref<!tpu.dma_semaphore, #tpu.memory_space<semaphore_mem>>)
    %c0 = arith.constant 0 : index
    %c0_60 = arith.constant 0 : index
    %60 = vector.load %arg2[%c0, %c0_60] : memref<19x128xf32, #tpu.memory_space<vmem>>, vector<19x128xf32>
    %c0_61 = arith.constant 0 : index
    %c0_62 = arith.constant 0 : index
    %61 = vector.load %arg0[%c0_61, %c0_62] : memref<8x32xf32, #tpu.memory_space<vmem>>, vector<8x32xf32>
    %c0_i32_63 = arith.constant 0 : i32
    %c0_i32_64 = arith.constant 0 : i32
    %c0_i32_65 = arith.constant 0 : i32
    %c0_i32_66 = arith.constant 0 : i32
    %c0_i32_67 = arith.constant 0 : i32
    %62 = tpu.memref_slice %arg1[%c0_i32_63, %c0_i32_66, %c0_i32_67] : memref<10x128x128xbf16, #tpu.memory_space<any>> -> memref<1x128x128xbf16, #tpu.memory_space<any>>
    %63 = tpu.memref_squeeze %62 : memref<1x128x128xbf16, #tpu.memory_space<any>> -> memref<128x128xbf16, #tpu.memory_space<any>>
    %c0_i32_68 = arith.constant 0 : i32
    %c0_i32_69 = arith.constant 0 : i32
    %64 = tpu.memref_slice %arg4[%c0_i32_64, %c0_i32_68, %c0_i32_69] : memref<10x128x128xbf16, #tpu.memory_space<vmem>> -> memref<1x128x128xbf16, #tpu.memory_space<vmem>>
    %65 = tpu.memref_squeeze %64 : memref<1x128x128xbf16, #tpu.memory_space<vmem>> -> memref<128x128xbf16, #tpu.memory_space<vmem>>
    %66 = tpu.memref_slice %arg5[%c0_i32_65] : memref<10x!tpu.dma_semaphore, #tpu.memory_space<semaphore_mem>> -> memref<1x!tpu.dma_semaphore, #tpu.memory_space<semaphore_mem>>
    %67 = tpu.memref_squeeze %66 : memref<1x!tpu.dma_semaphore, #tpu.memory_space<semaphore_mem>> -> memref<!tpu.dma_semaphore, #tpu.memory_space<semaphore_mem>>
    tpu.wait_dma2 semaphore(%67 : memref<!tpu.dma_semaphore, #tpu.memory_space<semaphore_mem>>) src(%63 : memref<128x128xbf16, #tpu.memory_space<any>>) dst(%65 : memref<128x128xbf16, #tpu.memory_space<vmem>>)
    %c0_70 = arith.constant 0 : index
    %c0_71 = arith.constant 0 : index
    %c0_72 = arith.constant 0 : index
    %68 = vector.load %arg4[%c0_70, %c0_71, %c0_72] : memref<10x128x128xbf16, #tpu.memory_space<vmem>>, vector<1x32x128xbf16>
    %69 = vector.shape_cast %68 : vector<1x32x128xbf16> to vector<32x128xbf16>
    %70 = arith.truncf %61 : vector<8x32xf32> to vector<8x32xbf16>
    %cst = arith.constant dense<0.000000e+00> : vector<8x128xf32>
    %71 = tpu.matmul %70, %69, %cst {dimension_numbers = #tpu.dot_dimension_numbers<[1], [0], [0], [1], [0, 0, 1, 1], [], []>} : vector<8x32xbf16>, vector<32x128xbf16>, vector<8x128xf32> -> vector<8x128xf32>
    %cst_73 = arith.constant dense<0.000000e+00> : vector<128xf32>
    %72 = vector.multi_reduction <add>, %71, %cst_73 [0] : vector<8x128xf32> to vector<128xf32>
    %73 = vector.shape_cast %72 : vector<128xf32> to vector<1x128xf32>
    %cst_74 = arith.constant 8.000000e+00 : f32
    %74 = vector.broadcast %cst_74 : f32 to vector<1x128xf32>
    %75 = arith.divf %73, %74 : vector<1x128xf32>
    %76 = arith.mulf %71, %71 : vector<8x128xf32>
    %cst_75 = arith.constant dense<0.000000e+00> : vector<128xf32>
    %77 = vector.multi_reduction <add>, %76, %cst_75 [0] : vector<8x128xf32> to vector<128xf32>
    %78 = vector.shape_cast %77 : vector<128xf32> to vector<1x128xf32>
    %cst_76 = arith.constant 8.000000e+00 : f32
    %79 = vector.broadcast %cst_76 : f32 to vector<1x128xf32>
    %80 = arith.divf %78, %79 : vector<1x128xf32>
    %81 = arith.mulf %75, %75 : vector<1x128xf32>
    %82 = arith.subf %80, %81 : vector<1x128xf32>
    %cst_77 = arith.constant 0.000000e+00 : f32
    %83 = vector.broadcast %cst_77 : f32 to vector<1x128xf32>
    %84 = arith.maximumf %82, %83 : vector<1x128xf32>
    %85 = vector.extract_strided_slice %60 {offsets = [0, 0], sizes = [1, 128], strides = [1, 1]} : vector<19x128xf32> to vector<1x128xf32>
    %86 = vector.extract_strided_slice %60 {offsets = [9, 0], sizes = [1, 128], strides = [1, 1]} : vector<19x128xf32> to vector<1x128xf32>
    %cst_78 = arith.constant 9.99999974E-6 : f32
    %87 = vector.broadcast %cst_78 : f32 to vector<1x128xf32>
    %88 = arith.addf %84, %87 : vector<1x128xf32>
    %89 = math.rsqrt %88 : vector<1x128xf32>
    %90 = arith.mulf %85, %89 : vector<1x128xf32>
    %91 = arith.mulf %75, %90 : vector<1x128xf32>
    %92 = arith.subf %86, %91 : vector<1x128xf32>
    %93 = vector.broadcast %90 : vector<1x128xf32> to vector<8x128xf32>
    %94 = arith.mulf %71, %93 : vector<8x128xf32>
    %95 = vector.broadcast %92 : vector<1x128xf32> to vector<8x128xf32>
    %96 = arith.addf %94, %95 : vector<8x128xf32>
    %cst_79 = arith.constant 0.000000e+00 : f32
    %97 = vector.broadcast %cst_79 : f32 to vector<8x128xf32>
    %98 = arith.maximumf %96, %97 : vector<8x128xf32>
    %c1_i32_80 = arith.constant 1 : i32
    %c1_i32_81 = arith.constant 1 : i32
    %c1_i32_82 = arith.constant 1 : i32
    %c0_i32_83 = arith.constant 0 : i32
    %c0_i32_84 = arith.constant 0 : i32
    %99 = tpu.memref_slice %arg1[%c1_i32_80, %c0_i32_83, %c0_i32_84] : memref<10x128x128xbf16, #tpu.memory_space<any>> -> memref<1x128x128xbf16, #tpu.memory_space<any>>
    %100 = tpu.memref_squeeze %99 : memref<1x128x128xbf16, #tpu.memory_space<any>> -> memref<128x128xbf16, #tpu.memory_space<any>>
    %c0_i32_85 = arith.constant 0 : i32
    %c0_i32_86 = arith.constant 0 : i32
    %101 = tpu.memref_slice %arg4[%c1_i32_81, %c0_i32_85, %c0_i32_86] : memref<10x128x128xbf16, #tpu.memory_space<vmem>> -> memref<1x128x128xbf16, #tpu.memory_space<vmem>>
    %102 = tpu.memref_squeeze %101 : memref<1x128x128xbf16, #tpu.memory_space<vmem>> -> memref<128x128xbf16, #tpu.memory_space<vmem>>
    %103 = tpu.memref_slice %arg5[%c1_i32_82] : memref<10x!tpu.dma_semaphore, #tpu.memory_space<semaphore_mem>> -> memref<1x!tpu.dma_semaphore, #tpu.memory_space<semaphore_mem>>
    %104 = tpu.memref_squeeze %103 : memref<1x!tpu.dma_semaphore, #tpu.memory_space<semaphore_mem>> -> memref<!tpu.dma_semaphore, #tpu.memory_space<semaphore_mem>>
    tpu.wait_dma2 semaphore(%104 : memref<!tpu.dma_semaphore, #tpu.memory_space<semaphore_mem>>) src(%100 : memref<128x128xbf16, #tpu.memory_space<any>>) dst(%102 : memref<128x128xbf16, #tpu.memory_space<vmem>>)
    %c1 = arith.constant 1 : index
    %c0_87 = arith.constant 0 : index
    %c0_88 = arith.constant 0 : index
    %105 = vector.load %arg4[%c1, %c0_87, %c0_88] : memref<10x128x128xbf16, #tpu.memory_space<vmem>>, vector<1x128x128xbf16>
    %106 = vector.shape_cast %105 : vector<1x128x128xbf16> to vector<128x128xbf16>
    %107 = arith.truncf %98 : vector<8x128xf32> to vector<8x128xbf16>
    %cst_89 = arith.constant dense<0.000000e+00> : vector<8x128xf32>
    %108 = tpu.matmul %107, %106, %cst_89 {dimension_numbers = #tpu.dot_dimension_numbers<[1], [0], [0], [1], [0, 0, 1, 1], [], []>} : vector<8x128xbf16>, vector<128x128xbf16>, vector<8x128xf32> -> vector<8x128xf32>
    %cst_90 = arith.constant dense<0.000000e+00> : vector<128xf32>
    %109 = vector.multi_reduction <add>, %108, %cst_90 [0] : vector<8x128xf32> to vector<128xf32>
    %110 = vector.shape_cast %109 : vector<128xf32> to vector<1x128xf32>
    %cst_91 = arith.constant 8.000000e+00 : f32
    %111 = vector.broadcast %cst_91 : f32 to vector<1x128xf32>
    %112 = arith.divf %110, %111 : vector<1x128xf32>
    %113 = arith.mulf %108, %108 : vector<8x128xf32>
    %cst_92 = arith.constant dense<0.000000e+00> : vector<128xf32>
    %114 = vector.multi_reduction <add>, %113, %cst_92 [0] : vector<8x128xf32> to vector<128xf32>
    %115 = vector.shape_cast %114 : vector<128xf32> to vector<1x128xf32>
    %cst_93 = arith.constant 8.000000e+00 : f32
    %116 = vector.broadcast %cst_93 : f32 to vector<1x128xf32>
    %117 = arith.divf %115, %116 : vector<1x128xf32>
    %118 = arith.mulf %112, %112 : vector<1x128xf32>
    %119 = arith.subf %117, %118 : vector<1x128xf32>
    %cst_94 = arith.constant 0.000000e+00 : f32
    %120 = vector.broadcast %cst_94 : f32 to vector<1x128xf32>
    %121 = arith.maximumf %119, %120 : vector<1x128xf32>
    %122 = vector.extract_strided_slice %60 {offsets = [1, 0], sizes = [1, 128], strides = [1, 1]} : vector<19x128xf32> to vector<1x128xf32>
    %123 = vector.extract_strided_slice %60 {offsets = [10, 0], sizes = [1, 128], strides = [1, 1]} : vector<19x128xf32> to vector<1x128xf32>
    %cst_95 = arith.constant 9.99999974E-6 : f32
    %124 = vector.broadcast %cst_95 : f32 to vector<1x128xf32>
    %125 = arith.addf %121, %124 : vector<1x128xf32>
    %126 = math.rsqrt %125 : vector<1x128xf32>
    %127 = arith.mulf %122, %126 : vector<1x128xf32>
    %128 = arith.mulf %112, %127 : vector<1x128xf32>
    %129 = arith.subf %123, %128 : vector<1x128xf32>
    %130 = vector.broadcast %127 : vector<1x128xf32> to vector<8x128xf32>
    %131 = arith.mulf %108, %130 : vector<8x128xf32>
    %132 = vector.broadcast %129 : vector<1x128xf32> to vector<8x128xf32>
    %133 = arith.addf %131, %132 : vector<8x128xf32>
    %cst_96 = arith.constant 0.000000e+00 : f32
    %134 = vector.broadcast %cst_96 : f32 to vector<8x128xf32>
    %135 = arith.maximumf %133, %134 : vector<8x128xf32>
    %c2_i32_97 = arith.constant 2 : i32
    %c2_i32_98 = arith.constant 2 : i32
    %c2_i32_99 = arith.constant 2 : i32
    %c0_i32_100 = arith.constant 0 : i32
    %c0_i32_101 = arith.constant 0 : i32
    %136 = tpu.memref_slice %arg1[%c2_i32_97, %c0_i32_100, %c0_i32_101] : memref<10x128x128xbf16, #tpu.memory_space<any>> -> memref<1x128x128xbf16, #tpu.memory_space<any>>
    %137 = tpu.memref_squeeze %136 : memref<1x128x128xbf16, #tpu.memory_space<any>> -> memref<128x128xbf16, #tpu.memory_space<any>>
    %c0_i32_102 = arith.constant 0 : i32
    %c0_i32_103 = arith.constant 0 : i32
    %138 = tpu.memref_slice %arg4[%c2_i32_98, %c0_i32_102, %c0_i32_103] : memref<10x128x128xbf16, #tpu.memory_space<vmem>> -> memref<1x128x128xbf16, #tpu.memory_space<vmem>>
    %139 = tpu.memref_squeeze %138 : memref<1x128x128xbf16, #tpu.memory_space<vmem>> -> memref<128x128xbf16, #tpu.memory_space<vmem>>
    %140 = tpu.memref_slice %arg5[%c2_i32_99] : memref<10x!tpu.dma_semaphore, #tpu.memory_space<semaphore_mem>> -> memref<1x!tpu.dma_semaphore, #tpu.memory_space<semaphore_mem>>
    %141 = tpu.memref_squeeze %140 : memref<1x!tpu.dma_semaphore, #tpu.memory_space<semaphore_mem>> -> memref<!tpu.dma_semaphore, #tpu.memory_space<semaphore_mem>>
    tpu.wait_dma2 semaphore(%141 : memref<!tpu.dma_semaphore, #tpu.memory_space<semaphore_mem>>) src(%137 : memref<128x128xbf16, #tpu.memory_space<any>>) dst(%139 : memref<128x128xbf16, #tpu.memory_space<vmem>>)
    %c2 = arith.constant 2 : index
    %c0_104 = arith.constant 0 : index
    %c0_105 = arith.constant 0 : index
    %142 = vector.load %arg4[%c2, %c0_104, %c0_105] : memref<10x128x128xbf16, #tpu.memory_space<vmem>>, vector<1x128x128xbf16>
    %143 = vector.shape_cast %142 : vector<1x128x128xbf16> to vector<128x128xbf16>
    %144 = arith.truncf %135 : vector<8x128xf32> to vector<8x128xbf16>
    %cst_106 = arith.constant dense<0.000000e+00> : vector<8x128xf32>
    %145 = tpu.matmul %144, %143, %cst_106 {dimension_numbers = #tpu.dot_dimension_numbers<[1], [0], [0], [1], [0, 0, 1, 1], [], []>} : vector<8x128xbf16>, vector<128x128xbf16>, vector<8x128xf32> -> vector<8x128xf32>
    %cst_107 = arith.constant dense<0.000000e+00> : vector<128xf32>
    %146 = vector.multi_reduction <add>, %145, %cst_107 [0] : vector<8x128xf32> to vector<128xf32>
    %147 = vector.shape_cast %146 : vector<128xf32> to vector<1x128xf32>
    %cst_108 = arith.constant 8.000000e+00 : f32
    %148 = vector.broadcast %cst_108 : f32 to vector<1x128xf32>
    %149 = arith.divf %147, %148 : vector<1x128xf32>
    %150 = arith.mulf %145, %145 : vector<8x128xf32>
    %cst_109 = arith.constant dense<0.000000e+00> : vector<128xf32>
    %151 = vector.multi_reduction <add>, %150, %cst_109 [0] : vector<8x128xf32> to vector<128xf32>
    %152 = vector.shape_cast %151 : vector<128xf32> to vector<1x128xf32>
    %cst_110 = arith.constant 8.000000e+00 : f32
    %153 = vector.broadcast %cst_110 : f32 to vector<1x128xf32>
    %154 = arith.divf %152, %153 : vector<1x128xf32>
    %155 = arith.mulf %149, %149 : vector<1x128xf32>
    %156 = arith.subf %154, %155 : vector<1x128xf32>
    %cst_111 = arith.constant 0.000000e+00 : f32
    %157 = vector.broadcast %cst_111 : f32 to vector<1x128xf32>
    %158 = arith.maximumf %156, %157 : vector<1x128xf32>
    %159 = vector.extract_strided_slice %60 {offsets = [2, 0], sizes = [1, 128], strides = [1, 1]} : vector<19x128xf32> to vector<1x128xf32>
    %160 = vector.extract_strided_slice %60 {offsets = [11, 0], sizes = [1, 128], strides = [1, 1]} : vector<19x128xf32> to vector<1x128xf32>
    %cst_112 = arith.constant 9.99999974E-6 : f32
    %161 = vector.broadcast %cst_112 : f32 to vector<1x128xf32>
    %162 = arith.addf %158, %161 : vector<1x128xf32>
    %163 = math.rsqrt %162 : vector<1x128xf32>
    %164 = arith.mulf %159, %163 : vector<1x128xf32>
    %165 = arith.mulf %149, %164 : vector<1x128xf32>
    %166 = arith.subf %160, %165 : vector<1x128xf32>
    %167 = vector.broadcast %164 : vector<1x128xf32> to vector<8x128xf32>
    %168 = arith.mulf %145, %167 : vector<8x128xf32>
    %169 = vector.broadcast %166 : vector<1x128xf32> to vector<8x128xf32>
    %170 = arith.addf %168, %169 : vector<8x128xf32>
    %cst_113 = arith.constant 0.000000e+00 : f32
    %171 = vector.broadcast %cst_113 : f32 to vector<8x128xf32>
    %172 = arith.maximumf %170, %171 : vector<8x128xf32>
    %c3_i32_114 = arith.constant 3 : i32
    %c3_i32_115 = arith.constant 3 : i32
    %c3_i32_116 = arith.constant 3 : i32
    %c0_i32_117 = arith.constant 0 : i32
    %c0_i32_118 = arith.constant 0 : i32
    %173 = tpu.memref_slice %arg1[%c3_i32_114, %c0_i32_117, %c0_i32_118] : memref<10x128x128xbf16, #tpu.memory_space<any>> -> memref<1x128x128xbf16, #tpu.memory_space<any>>
    %174 = tpu.memref_squeeze %173 : memref<1x128x128xbf16, #tpu.memory_space<any>> -> memref<128x128xbf16, #tpu.memory_space<any>>
    %c0_i32_119 = arith.constant 0 : i32
    %c0_i32_120 = arith.constant 0 : i32
    %175 = tpu.memref_slice %arg4[%c3_i32_115, %c0_i32_119, %c0_i32_120] : memref<10x128x128xbf16, #tpu.memory_space<vmem>> -> memref<1x128x128xbf16, #tpu.memory_space<vmem>>
    %176 = tpu.memref_squeeze %175 : memref<1x128x128xbf16, #tpu.memory_space<vmem>> -> memref<128x128xbf16, #tpu.memory_space<vmem>>
    %177 = tpu.memref_slice %arg5[%c3_i32_116] : memref<10x!tpu.dma_semaphore, #tpu.memory_space<semaphore_mem>> -> memref<1x!tpu.dma_semaphore, #tpu.memory_space<semaphore_mem>>
    %178 = tpu.memref_squeeze %177 : memref<1x!tpu.dma_semaphore, #tpu.memory_space<semaphore_mem>> -> memref<!tpu.dma_semaphore, #tpu.memory_space<semaphore_mem>>
    tpu.wait_dma2 semaphore(%178 : memref<!tpu.dma_semaphore, #tpu.memory_space<semaphore_mem>>) src(%174 : memref<128x128xbf16, #tpu.memory_space<any>>) dst(%176 : memref<128x128xbf16, #tpu.memory_space<vmem>>)
    %c3 = arith.constant 3 : index
    %c0_121 = arith.constant 0 : index
    %c0_122 = arith.constant 0 : index
    %179 = vector.load %arg4[%c3, %c0_121, %c0_122] : memref<10x128x128xbf16, #tpu.memory_space<vmem>>, vector<1x128x128xbf16>
    %180 = vector.shape_cast %179 : vector<1x128x128xbf16> to vector<128x128xbf16>
    %181 = arith.truncf %172 : vector<8x128xf32> to vector<8x128xbf16>
    %cst_123 = arith.constant dense<0.000000e+00> : vector<8x128xf32>
    %182 = tpu.matmul %181, %180, %cst_123 {dimension_numbers = #tpu.dot_dimension_numbers<[1], [0], [0], [1], [0, 0, 1, 1], [], []>} : vector<8x128xbf16>, vector<128x128xbf16>, vector<8x128xf32> -> vector<8x128xf32>
    %cst_124 = arith.constant dense<0.000000e+00> : vector<128xf32>
    %183 = vector.multi_reduction <add>, %182, %cst_124 [0] : vector<8x128xf32> to vector<128xf32>
    %184 = vector.shape_cast %183 : vector<128xf32> to vector<1x128xf32>
    %cst_125 = arith.constant 8.000000e+00 : f32
    %185 = vector.broadcast %cst_125 : f32 to vector<1x128xf32>
    %186 = arith.divf %184, %185 : vector<1x128xf32>
    %187 = arith.mulf %182, %182 : vector<8x128xf32>
    %cst_126 = arith.constant dense<0.000000e+00> : vector<128xf32>
    %188 = vector.multi_reduction <add>, %187, %cst_126 [0] : vector<8x128xf32> to vector<128xf32>
    %189 = vector.shape_cast %188 : vector<128xf32> to vector<1x128xf32>
    %cst_127 = arith.constant 8.000000e+00 : f32
    %190 = vector.broadcast %cst_127 : f32 to vector<1x128xf32>
    %191 = arith.divf %189, %190 : vector<1x128xf32>
    %192 = arith.mulf %186, %186 : vector<1x128xf32>
    %193 = arith.subf %191, %192 : vector<1x128xf32>
    %cst_128 = arith.constant 0.000000e+00 : f32
    %194 = vector.broadcast %cst_128 : f32 to vector<1x128xf32>
    %195 = arith.maximumf %193, %194 : vector<1x128xf32>
    %196 = vector.extract_strided_slice %60 {offsets = [3, 0], sizes = [1, 128], strides = [1, 1]} : vector<19x128xf32> to vector<1x128xf32>
    %197 = vector.extract_strided_slice %60 {offsets = [12, 0], sizes = [1, 128], strides = [1, 1]} : vector<19x128xf32> to vector<1x128xf32>
    %cst_129 = arith.constant 9.99999974E-6 : f32
    %198 = vector.broadcast %cst_129 : f32 to vector<1x128xf32>
    %199 = arith.addf %195, %198 : vector<1x128xf32>
    %200 = math.rsqrt %199 : vector<1x128xf32>
    %201 = arith.mulf %196, %200 : vector<1x128xf32>
    %202 = arith.mulf %186, %201 : vector<1x128xf32>
    %203 = arith.subf %197, %202 : vector<1x128xf32>
    %204 = vector.broadcast %201 : vector<1x128xf32> to vector<8x128xf32>
    %205 = arith.mulf %182, %204 : vector<8x128xf32>
    %206 = vector.broadcast %203 : vector<1x128xf32> to vector<8x128xf32>
    %207 = arith.addf %205, %206 : vector<8x128xf32>
    %cst_130 = arith.constant 0.000000e+00 : f32
    %208 = vector.broadcast %cst_130 : f32 to vector<8x128xf32>
    %209 = arith.maximumf %207, %208 : vector<8x128xf32>
    %c4_i32_131 = arith.constant 4 : i32
    %c4_i32_132 = arith.constant 4 : i32
    %c4_i32_133 = arith.constant 4 : i32
    %c0_i32_134 = arith.constant 0 : i32
    %c0_i32_135 = arith.constant 0 : i32
    %210 = tpu.memref_slice %arg1[%c4_i32_131, %c0_i32_134, %c0_i32_135] : memref<10x128x128xbf16, #tpu.memory_space<any>> -> memref<1x128x128xbf16, #tpu.memory_space<any>>
    %211 = tpu.memref_squeeze %210 : memref<1x128x128xbf16, #tpu.memory_space<any>> -> memref<128x128xbf16, #tpu.memory_space<any>>
    %c0_i32_136 = arith.constant 0 : i32
    %c0_i32_137 = arith.constant 0 : i32
    %212 = tpu.memref_slice %arg4[%c4_i32_132, %c0_i32_136, %c0_i32_137] : memref<10x128x128xbf16, #tpu.memory_space<vmem>> -> memref<1x128x128xbf16, #tpu.memory_space<vmem>>
    %213 = tpu.memref_squeeze %212 : memref<1x128x128xbf16, #tpu.memory_space<vmem>> -> memref<128x128xbf16, #tpu.memory_space<vmem>>
    %214 = tpu.memref_slice %arg5[%c4_i32_133] : memref<10x!tpu.dma_semaphore, #tpu.memory_space<semaphore_mem>> -> memref<1x!tpu.dma_semaphore, #tpu.memory_space<semaphore_mem>>
    %215 = tpu.memref_squeeze %214 : memref<1x!tpu.dma_semaphore, #tpu.memory_space<semaphore_mem>> -> memref<!tpu.dma_semaphore, #tpu.memory_space<semaphore_mem>>
    tpu.wait_dma2 semaphore(%215 : memref<!tpu.dma_semaphore, #tpu.memory_space<semaphore_mem>>) src(%211 : memref<128x128xbf16, #tpu.memory_space<any>>) dst(%213 : memref<128x128xbf16, #tpu.memory_space<vmem>>)
    %c4 = arith.constant 4 : index
    %c0_138 = arith.constant 0 : index
    %c0_139 = arith.constant 0 : index
    %216 = vector.load %arg4[%c4, %c0_138, %c0_139] : memref<10x128x128xbf16, #tpu.memory_space<vmem>>, vector<1x128x128xbf16>
    %217 = vector.shape_cast %216 : vector<1x128x128xbf16> to vector<128x128xbf16>
    %218 = arith.truncf %209 : vector<8x128xf32> to vector<8x128xbf16>
    %cst_140 = arith.constant dense<0.000000e+00> : vector<8x128xf32>
    %219 = tpu.matmul %218, %217, %cst_140 {dimension_numbers = #tpu.dot_dimension_numbers<[1], [0], [0], [1], [0, 0, 1, 1], [], []>} : vector<8x128xbf16>, vector<128x128xbf16>, vector<8x128xf32> -> vector<8x128xf32>
    %cst_141 = arith.constant dense<0.000000e+00> : vector<128xf32>
    %220 = vector.multi_reduction <add>, %219, %cst_141 [0] : vector<8x128xf32> to vector<128xf32>
    %221 = vector.shape_cast %220 : vector<128xf32> to vector<1x128xf32>
    %cst_142 = arith.constant 8.000000e+00 : f32
    %222 = vector.broadcast %cst_142 : f32 to vector<1x128xf32>
    %223 = arith.divf %221, %222 : vector<1x128xf32>
    %224 = arith.mulf %219, %219 : vector<8x128xf32>
    %cst_143 = arith.constant dense<0.000000e+00> : vector<128xf32>
    %225 = vector.multi_reduction <add>, %224, %cst_143 [0] : vector<8x128xf32> to vector<128xf32>
    %226 = vector.shape_cast %225 : vector<128xf32> to vector<1x128xf32>
    %cst_144 = arith.constant 8.000000e+00 : f32
    %227 = vector.broadcast %cst_144 : f32 to vector<1x128xf32>
    %228 = arith.divf %226, %227 : vector<1x128xf32>
    %229 = arith.mulf %223, %223 : vector<1x128xf32>
    %230 = arith.subf %228, %229 : vector<1x128xf32>
    %cst_145 = arith.constant 0.000000e+00 : f32
    %231 = vector.broadcast %cst_145 : f32 to vector<1x128xf32>
    %232 = arith.maximumf %230, %231 : vector<1x128xf32>
    %233 = vector.extract_strided_slice %60 {offsets = [4, 0], sizes = [1, 128], strides = [1, 1]} : vector<19x128xf32> to vector<1x128xf32>
    %234 = vector.extract_strided_slice %60 {offsets = [13, 0], sizes = [1, 128], strides = [1, 1]} : vector<19x128xf32> to vector<1x128xf32>
    %cst_146 = arith.constant 9.99999974E-6 : f32
    %235 = vector.broadcast %cst_146 : f32 to vector<1x128xf32>
    %236 = arith.addf %232, %235 : vector<1x128xf32>
    %237 = math.rsqrt %236 : vector<1x128xf32>
    %238 = arith.mulf %233, %237 : vector<1x128xf32>
    %239 = arith.mulf %223, %238 : vector<1x128xf32>
    %240 = arith.subf %234, %239 : vector<1x128xf32>
    %241 = vector.broadcast %238 : vector<1x128xf32> to vector<8x128xf32>
    %242 = arith.mulf %219, %241 : vector<8x128xf32>
    %243 = vector.broadcast %240 : vector<1x128xf32> to vector<8x128xf32>
    %244 = arith.addf %242, %243 : vector<8x128xf32>
    %cst_147 = arith.constant 0.000000e+00 : f32
    %245 = vector.broadcast %cst_147 : f32 to vector<8x128xf32>
    %246 = arith.maximumf %244, %245 : vector<8x128xf32>
    %c5_i32_148 = arith.constant 5 : i32
    %c5_i32_149 = arith.constant 5 : i32
    %c5_i32_150 = arith.constant 5 : i32
    %c0_i32_151 = arith.constant 0 : i32
    %c0_i32_152 = arith.constant 0 : i32
    %247 = tpu.memref_slice %arg1[%c5_i32_148, %c0_i32_151, %c0_i32_152] : memref<10x128x128xbf16, #tpu.memory_space<any>> -> memref<1x128x128xbf16, #tpu.memory_space<any>>
    %248 = tpu.memref_squeeze %247 : memref<1x128x128xbf16, #tpu.memory_space<any>> -> memref<128x128xbf16, #tpu.memory_space<any>>
    %c0_i32_153 = arith.constant 0 : i32
    %c0_i32_154 = arith.constant 0 : i32
    %249 = tpu.memref_slice %arg4[%c5_i32_149, %c0_i32_153, %c0_i32_154] : memref<10x128x128xbf16, #tpu.memory_space<vmem>> -> memref<1x128x128xbf16, #tpu.memory_space<vmem>>
    %250 = tpu.memref_squeeze %249 : memref<1x128x128xbf16, #tpu.memory_space<vmem>> -> memref<128x128xbf16, #tpu.memory_space<vmem>>
    %251 = tpu.memref_slice %arg5[%c5_i32_150] : memref<10x!tpu.dma_semaphore, #tpu.memory_space<semaphore_mem>> -> memref<1x!tpu.dma_semaphore, #tpu.memory_space<semaphore_mem>>
    %252 = tpu.memref_squeeze %251 : memref<1x!tpu.dma_semaphore, #tpu.memory_space<semaphore_mem>> -> memref<!tpu.dma_semaphore, #tpu.memory_space<semaphore_mem>>
    tpu.wait_dma2 semaphore(%252 : memref<!tpu.dma_semaphore, #tpu.memory_space<semaphore_mem>>) src(%248 : memref<128x128xbf16, #tpu.memory_space<any>>) dst(%250 : memref<128x128xbf16, #tpu.memory_space<vmem>>)
    %c5 = arith.constant 5 : index
    %c0_155 = arith.constant 0 : index
    %c0_156 = arith.constant 0 : index
    %253 = vector.load %arg4[%c5, %c0_155, %c0_156] : memref<10x128x128xbf16, #tpu.memory_space<vmem>>, vector<1x128x128xbf16>
    %254 = vector.shape_cast %253 : vector<1x128x128xbf16> to vector<128x128xbf16>
    %255 = arith.truncf %246 : vector<8x128xf32> to vector<8x128xbf16>
    %cst_157 = arith.constant dense<0.000000e+00> : vector<8x128xf32>
    %256 = tpu.matmul %255, %254, %cst_157 {dimension_numbers = #tpu.dot_dimension_numbers<[1], [0], [0], [1], [0, 0, 1, 1], [], []>} : vector<8x128xbf16>, vector<128x128xbf16>, vector<8x128xf32> -> vector<8x128xf32>
    %cst_158 = arith.constant dense<0.000000e+00> : vector<128xf32>
    %257 = vector.multi_reduction <add>, %256, %cst_158 [0] : vector<8x128xf32> to vector<128xf32>
    %258 = vector.shape_cast %257 : vector<128xf32> to vector<1x128xf32>
    %cst_159 = arith.constant 8.000000e+00 : f32
    %259 = vector.broadcast %cst_159 : f32 to vector<1x128xf32>
    %260 = arith.divf %258, %259 : vector<1x128xf32>
    %261 = arith.mulf %256, %256 : vector<8x128xf32>
    %cst_160 = arith.constant dense<0.000000e+00> : vector<128xf32>
    %262 = vector.multi_reduction <add>, %261, %cst_160 [0] : vector<8x128xf32> to vector<128xf32>
    %263 = vector.shape_cast %262 : vector<128xf32> to vector<1x128xf32>
    %cst_161 = arith.constant 8.000000e+00 : f32
    %264 = vector.broadcast %cst_161 : f32 to vector<1x128xf32>
    %265 = arith.divf %263, %264 : vector<1x128xf32>
    %266 = arith.mulf %260, %260 : vector<1x128xf32>
    %267 = arith.subf %265, %266 : vector<1x128xf32>
    %cst_162 = arith.constant 0.000000e+00 : f32
    %268 = vector.broadcast %cst_162 : f32 to vector<1x128xf32>
    %269 = arith.maximumf %267, %268 : vector<1x128xf32>
    %270 = vector.extract_strided_slice %60 {offsets = [5, 0], sizes = [1, 128], strides = [1, 1]} : vector<19x128xf32> to vector<1x128xf32>
    %271 = vector.extract_strided_slice %60 {offsets = [14, 0], sizes = [1, 128], strides = [1, 1]} : vector<19x128xf32> to vector<1x128xf32>
    %cst_163 = arith.constant 9.99999974E-6 : f32
    %272 = vector.broadcast %cst_163 : f32 to vector<1x128xf32>
    %273 = arith.addf %269, %272 : vector<1x128xf32>
    %274 = math.rsqrt %273 : vector<1x128xf32>
    %275 = arith.mulf %270, %274 : vector<1x128xf32>
    %276 = arith.mulf %260, %275 : vector<1x128xf32>
    %277 = arith.subf %271, %276 : vector<1x128xf32>
    %278 = vector.broadcast %275 : vector<1x128xf32> to vector<8x128xf32>
    %279 = arith.mulf %256, %278 : vector<8x128xf32>
    %280 = vector.broadcast %277 : vector<1x128xf32> to vector<8x128xf32>
    %281 = arith.addf %279, %280 : vector<8x128xf32>
    %cst_164 = arith.constant 0.000000e+00 : f32
    %282 = vector.broadcast %cst_164 : f32 to vector<8x128xf32>
    %283 = arith.maximumf %281, %282 : vector<8x128xf32>
    %c6_i32_165 = arith.constant 6 : i32
    %c6_i32_166 = arith.constant 6 : i32
    %c6_i32_167 = arith.constant 6 : i32
    %c0_i32_168 = arith.constant 0 : i32
    %c0_i32_169 = arith.constant 0 : i32
    %284 = tpu.memref_slice %arg1[%c6_i32_165, %c0_i32_168, %c0_i32_169] : memref<10x128x128xbf16, #tpu.memory_space<any>> -> memref<1x128x128xbf16, #tpu.memory_space<any>>
    %285 = tpu.memref_squeeze %284 : memref<1x128x128xbf16, #tpu.memory_space<any>> -> memref<128x128xbf16, #tpu.memory_space<any>>
    %c0_i32_170 = arith.constant 0 : i32
    %c0_i32_171 = arith.constant 0 : i32
    %286 = tpu.memref_slice %arg4[%c6_i32_166, %c0_i32_170, %c0_i32_171] : memref<10x128x128xbf16, #tpu.memory_space<vmem>> -> memref<1x128x128xbf16, #tpu.memory_space<vmem>>
    %287 = tpu.memref_squeeze %286 : memref<1x128x128xbf16, #tpu.memory_space<vmem>> -> memref<128x128xbf16, #tpu.memory_space<vmem>>
    %288 = tpu.memref_slice %arg5[%c6_i32_167] : memref<10x!tpu.dma_semaphore, #tpu.memory_space<semaphore_mem>> -> memref<1x!tpu.dma_semaphore, #tpu.memory_space<semaphore_mem>>
    %289 = tpu.memref_squeeze %288 : memref<1x!tpu.dma_semaphore, #tpu.memory_space<semaphore_mem>> -> memref<!tpu.dma_semaphore, #tpu.memory_space<semaphore_mem>>
    tpu.wait_dma2 semaphore(%289 : memref<!tpu.dma_semaphore, #tpu.memory_space<semaphore_mem>>) src(%285 : memref<128x128xbf16, #tpu.memory_space<any>>) dst(%287 : memref<128x128xbf16, #tpu.memory_space<vmem>>)
    %c6 = arith.constant 6 : index
    %c0_172 = arith.constant 0 : index
    %c0_173 = arith.constant 0 : index
    %290 = vector.load %arg4[%c6, %c0_172, %c0_173] : memref<10x128x128xbf16, #tpu.memory_space<vmem>>, vector<1x128x128xbf16>
    %291 = vector.shape_cast %290 : vector<1x128x128xbf16> to vector<128x128xbf16>
    %292 = arith.truncf %283 : vector<8x128xf32> to vector<8x128xbf16>
    %cst_174 = arith.constant dense<0.000000e+00> : vector<8x128xf32>
    %293 = tpu.matmul %292, %291, %cst_174 {dimension_numbers = #tpu.dot_dimension_numbers<[1], [0], [0], [1], [0, 0, 1, 1], [], []>} : vector<8x128xbf16>, vector<128x128xbf16>, vector<8x128xf32> -> vector<8x128xf32>
    %cst_175 = arith.constant dense<0.000000e+00> : vector<128xf32>
    %294 = vector.multi_reduction <add>, %293, %cst_175 [0] : vector<8x128xf32> to vector<128xf32>
    %295 = vector.shape_cast %294 : vector<128xf32> to vector<1x128xf32>
    %cst_176 = arith.constant 8.000000e+00 : f32
    %296 = vector.broadcast %cst_176 : f32 to vector<1x128xf32>
    %297 = arith.divf %295, %296 : vector<1x128xf32>
    %298 = arith.mulf %293, %293 : vector<8x128xf32>
    %cst_177 = arith.constant dense<0.000000e+00> : vector<128xf32>
    %299 = vector.multi_reduction <add>, %298, %cst_177 [0] : vector<8x128xf32> to vector<128xf32>
    %300 = vector.shape_cast %299 : vector<128xf32> to vector<1x128xf32>
    %cst_178 = arith.constant 8.000000e+00 : f32
    %301 = vector.broadcast %cst_178 : f32 to vector<1x128xf32>
    %302 = arith.divf %300, %301 : vector<1x128xf32>
    %303 = arith.mulf %297, %297 : vector<1x128xf32>
    %304 = arith.subf %302, %303 : vector<1x128xf32>
    %cst_179 = arith.constant 0.000000e+00 : f32
    %305 = vector.broadcast %cst_179 : f32 to vector<1x128xf32>
    %306 = arith.maximumf %304, %305 : vector<1x128xf32>
    %307 = vector.extract_strided_slice %60 {offsets = [6, 0], sizes = [1, 128], strides = [1, 1]} : vector<19x128xf32> to vector<1x128xf32>
    %308 = vector.extract_strided_slice %60 {offsets = [15, 0], sizes = [1, 128], strides = [1, 1]} : vector<19x128xf32> to vector<1x128xf32>
    %cst_180 = arith.constant 9.99999974E-6 : f32
    %309 = vector.broadcast %cst_180 : f32 to vector<1x128xf32>
    %310 = arith.addf %306, %309 : vector<1x128xf32>
    %311 = math.rsqrt %310 : vector<1x128xf32>
    %312 = arith.mulf %307, %311 : vector<1x128xf32>
    %313 = arith.mulf %297, %312 : vector<1x128xf32>
    %314 = arith.subf %308, %313 : vector<1x128xf32>
    %315 = vector.broadcast %312 : vector<1x128xf32> to vector<8x128xf32>
    %316 = arith.mulf %293, %315 : vector<8x128xf32>
    %317 = vector.broadcast %314 : vector<1x128xf32> to vector<8x128xf32>
    %318 = arith.addf %316, %317 : vector<8x128xf32>
    %cst_181 = arith.constant 0.000000e+00 : f32
    %319 = vector.broadcast %cst_181 : f32 to vector<8x128xf32>
    %320 = arith.maximumf %318, %319 : vector<8x128xf32>
    %c7_i32_182 = arith.constant 7 : i32
    %c7_i32_183 = arith.constant 7 : i32
    %c7_i32_184 = arith.constant 7 : i32
    %c0_i32_185 = arith.constant 0 : i32
    %c0_i32_186 = arith.constant 0 : i32
    %321 = tpu.memref_slice %arg1[%c7_i32_182, %c0_i32_185, %c0_i32_186] : memref<10x128x128xbf16, #tpu.memory_space<any>> -> memref<1x128x128xbf16, #tpu.memory_space<any>>
    %322 = tpu.memref_squeeze %321 : memref<1x128x128xbf16, #tpu.memory_space<any>> -> memref<128x128xbf16, #tpu.memory_space<any>>
    %c0_i32_187 = arith.constant 0 : i32
    %c0_i32_188 = arith.constant 0 : i32
    %323 = tpu.memref_slice %arg4[%c7_i32_183, %c0_i32_187, %c0_i32_188] : memref<10x128x128xbf16, #tpu.memory_space<vmem>> -> memref<1x128x128xbf16, #tpu.memory_space<vmem>>
    %324 = tpu.memref_squeeze %323 : memref<1x128x128xbf16, #tpu.memory_space<vmem>> -> memref<128x128xbf16, #tpu.memory_space<vmem>>
    %325 = tpu.memref_slice %arg5[%c7_i32_184] : memref<10x!tpu.dma_semaphore, #tpu.memory_space<semaphore_mem>> -> memref<1x!tpu.dma_semaphore, #tpu.memory_space<semaphore_mem>>
    %326 = tpu.memref_squeeze %325 : memref<1x!tpu.dma_semaphore, #tpu.memory_space<semaphore_mem>> -> memref<!tpu.dma_semaphore, #tpu.memory_space<semaphore_mem>>
    tpu.wait_dma2 semaphore(%326 : memref<!tpu.dma_semaphore, #tpu.memory_space<semaphore_mem>>) src(%322 : memref<128x128xbf16, #tpu.memory_space<any>>) dst(%324 : memref<128x128xbf16, #tpu.memory_space<vmem>>)
    %c7 = arith.constant 7 : index
    %c0_189 = arith.constant 0 : index
    %c0_190 = arith.constant 0 : index
    %327 = vector.load %arg4[%c7, %c0_189, %c0_190] : memref<10x128x128xbf16, #tpu.memory_space<vmem>>, vector<1x128x128xbf16>
    %328 = vector.shape_cast %327 : vector<1x128x128xbf16> to vector<128x128xbf16>
    %329 = arith.truncf %320 : vector<8x128xf32> to vector<8x128xbf16>
    %cst_191 = arith.constant dense<0.000000e+00> : vector<8x128xf32>
    %330 = tpu.matmul %329, %328, %cst_191 {dimension_numbers = #tpu.dot_dimension_numbers<[1], [0], [0], [1], [0, 0, 1, 1], [], []>} : vector<8x128xbf16>, vector<128x128xbf16>, vector<8x128xf32> -> vector<8x128xf32>
    %cst_192 = arith.constant dense<0.000000e+00> : vector<128xf32>
    %331 = vector.multi_reduction <add>, %330, %cst_192 [0] : vector<8x128xf32> to vector<128xf32>
    %332 = vector.shape_cast %331 : vector<128xf32> to vector<1x128xf32>
    %cst_193 = arith.constant 8.000000e+00 : f32
    %333 = vector.broadcast %cst_193 : f32 to vector<1x128xf32>
    %334 = arith.divf %332, %333 : vector<1x128xf32>
    %335 = arith.mulf %330, %330 : vector<8x128xf32>
    %cst_194 = arith.constant dense<0.000000e+00> : vector<128xf32>
    %336 = vector.multi_reduction <add>, %335, %cst_194 [0] : vector<8x128xf32> to vector<128xf32>
    %337 = vector.shape_cast %336 : vector<128xf32> to vector<1x128xf32>
    %cst_195 = arith.constant 8.000000e+00 : f32
    %338 = vector.broadcast %cst_195 : f32 to vector<1x128xf32>
    %339 = arith.divf %337, %338 : vector<1x128xf32>
    %340 = arith.mulf %334, %334 : vector<1x128xf32>
    %341 = arith.subf %339, %340 : vector<1x128xf32>
    %cst_196 = arith.constant 0.000000e+00 : f32
    %342 = vector.broadcast %cst_196 : f32 to vector<1x128xf32>
    %343 = arith.maximumf %341, %342 : vector<1x128xf32>
    %344 = vector.extract_strided_slice %60 {offsets = [7, 0], sizes = [1, 128], strides = [1, 1]} : vector<19x128xf32> to vector<1x128xf32>
    %345 = vector.extract_strided_slice %60 {offsets = [16, 0], sizes = [1, 128], strides = [1, 1]} : vector<19x128xf32> to vector<1x128xf32>
    %cst_197 = arith.constant 9.99999974E-6 : f32
    %346 = vector.broadcast %cst_197 : f32 to vector<1x128xf32>
    %347 = arith.addf %343, %346 : vector<1x128xf32>
    %348 = math.rsqrt %347 : vector<1x128xf32>
    %349 = arith.mulf %344, %348 : vector<1x128xf32>
    %350 = arith.mulf %334, %349 : vector<1x128xf32>
    %351 = arith.subf %345, %350 : vector<1x128xf32>
    %352 = vector.broadcast %349 : vector<1x128xf32> to vector<8x128xf32>
    %353 = arith.mulf %330, %352 : vector<8x128xf32>
    %354 = vector.broadcast %351 : vector<1x128xf32> to vector<8x128xf32>
    %355 = arith.addf %353, %354 : vector<8x128xf32>
    %cst_198 = arith.constant 0.000000e+00 : f32
    %356 = vector.broadcast %cst_198 : f32 to vector<8x128xf32>
    %357 = arith.maximumf %355, %356 : vector<8x128xf32>
    %c8_i32_199 = arith.constant 8 : i32
    %c8_i32_200 = arith.constant 8 : i32
    %c8_i32_201 = arith.constant 8 : i32
    %c0_i32_202 = arith.constant 0 : i32
    %c0_i32_203 = arith.constant 0 : i32
    %358 = tpu.memref_slice %arg1[%c8_i32_199, %c0_i32_202, %c0_i32_203] : memref<10x128x128xbf16, #tpu.memory_space<any>> -> memref<1x128x128xbf16, #tpu.memory_space<any>>
    %359 = tpu.memref_squeeze %358 : memref<1x128x128xbf16, #tpu.memory_space<any>> -> memref<128x128xbf16, #tpu.memory_space<any>>
    %c0_i32_204 = arith.constant 0 : i32
    %c0_i32_205 = arith.constant 0 : i32
    %360 = tpu.memref_slice %arg4[%c8_i32_200, %c0_i32_204, %c0_i32_205] : memref<10x128x128xbf16, #tpu.memory_space<vmem>> -> memref<1x128x128xbf16, #tpu.memory_space<vmem>>
    %361 = tpu.memref_squeeze %360 : memref<1x128x128xbf16, #tpu.memory_space<vmem>> -> memref<128x128xbf16, #tpu.memory_space<vmem>>
    %362 = tpu.memref_slice %arg5[%c8_i32_201] : memref<10x!tpu.dma_semaphore, #tpu.memory_space<semaphore_mem>> -> memref<1x!tpu.dma_semaphore, #tpu.memory_space<semaphore_mem>>
    %363 = tpu.memref_squeeze %362 : memref<1x!tpu.dma_semaphore, #tpu.memory_space<semaphore_mem>> -> memref<!tpu.dma_semaphore, #tpu.memory_space<semaphore_mem>>
    tpu.wait_dma2 semaphore(%363 : memref<!tpu.dma_semaphore, #tpu.memory_space<semaphore_mem>>) src(%359 : memref<128x128xbf16, #tpu.memory_space<any>>) dst(%361 : memref<128x128xbf16, #tpu.memory_space<vmem>>)
    %c8 = arith.constant 8 : index
    %c0_206 = arith.constant 0 : index
    %c0_207 = arith.constant 0 : index
    %364 = vector.load %arg4[%c8, %c0_206, %c0_207] : memref<10x128x128xbf16, #tpu.memory_space<vmem>>, vector<1x128x128xbf16>
    %365 = vector.shape_cast %364 : vector<1x128x128xbf16> to vector<128x128xbf16>
    %366 = arith.truncf %357 : vector<8x128xf32> to vector<8x128xbf16>
    %cst_208 = arith.constant dense<0.000000e+00> : vector<8x128xf32>
    %367 = tpu.matmul %366, %365, %cst_208 {dimension_numbers = #tpu.dot_dimension_numbers<[1], [0], [0], [1], [0, 0, 1, 1], [], []>} : vector<8x128xbf16>, vector<128x128xbf16>, vector<8x128xf32> -> vector<8x128xf32>
    %cst_209 = arith.constant dense<0.000000e+00> : vector<128xf32>
    %368 = vector.multi_reduction <add>, %367, %cst_209 [0] : vector<8x128xf32> to vector<128xf32>
    %369 = vector.shape_cast %368 : vector<128xf32> to vector<1x128xf32>
    %cst_210 = arith.constant 8.000000e+00 : f32
    %370 = vector.broadcast %cst_210 : f32 to vector<1x128xf32>
    %371 = arith.divf %369, %370 : vector<1x128xf32>
    %372 = arith.mulf %367, %367 : vector<8x128xf32>
    %cst_211 = arith.constant dense<0.000000e+00> : vector<128xf32>
    %373 = vector.multi_reduction <add>, %372, %cst_211 [0] : vector<8x128xf32> to vector<128xf32>
    %374 = vector.shape_cast %373 : vector<128xf32> to vector<1x128xf32>
    %cst_212 = arith.constant 8.000000e+00 : f32
    %375 = vector.broadcast %cst_212 : f32 to vector<1x128xf32>
    %376 = arith.divf %374, %375 : vector<1x128xf32>
    %377 = arith.mulf %371, %371 : vector<1x128xf32>
    %378 = arith.subf %376, %377 : vector<1x128xf32>
    %cst_213 = arith.constant 0.000000e+00 : f32
    %379 = vector.broadcast %cst_213 : f32 to vector<1x128xf32>
    %380 = arith.maximumf %378, %379 : vector<1x128xf32>
    %381 = vector.extract_strided_slice %60 {offsets = [8, 0], sizes = [1, 128], strides = [1, 1]} : vector<19x128xf32> to vector<1x128xf32>
    %382 = vector.extract_strided_slice %60 {offsets = [17, 0], sizes = [1, 128], strides = [1, 1]} : vector<19x128xf32> to vector<1x128xf32>
    %cst_214 = arith.constant 9.99999974E-6 : f32
    %383 = vector.broadcast %cst_214 : f32 to vector<1x128xf32>
    %384 = arith.addf %380, %383 : vector<1x128xf32>
    %385 = math.rsqrt %384 : vector<1x128xf32>
    %386 = arith.mulf %381, %385 : vector<1x128xf32>
    %387 = arith.mulf %371, %386 : vector<1x128xf32>
    %388 = arith.subf %382, %387 : vector<1x128xf32>
    %389 = vector.broadcast %386 : vector<1x128xf32> to vector<8x128xf32>
    %390 = arith.mulf %367, %389 : vector<8x128xf32>
    %391 = vector.broadcast %388 : vector<1x128xf32> to vector<8x128xf32>
    %392 = arith.addf %390, %391 : vector<8x128xf32>
    %cst_215 = arith.constant 0.000000e+00 : f32
    %393 = vector.broadcast %cst_215 : f32 to vector<8x128xf32>
    %394 = arith.maximumf %392, %393 : vector<8x128xf32>
    %c9_i32_216 = arith.constant 9 : i32
    %c9_i32_217 = arith.constant 9 : i32
    %c9_i32_218 = arith.constant 9 : i32
    %c0_i32_219 = arith.constant 0 : i32
    %c0_i32_220 = arith.constant 0 : i32
    %395 = tpu.memref_slice %arg1[%c9_i32_216, %c0_i32_219, %c0_i32_220] : memref<10x128x128xbf16, #tpu.memory_space<any>> -> memref<1x128x128xbf16, #tpu.memory_space<any>>
    %396 = tpu.memref_squeeze %395 : memref<1x128x128xbf16, #tpu.memory_space<any>> -> memref<128x128xbf16, #tpu.memory_space<any>>
    %c0_i32_221 = arith.constant 0 : i32
    %c0_i32_222 = arith.constant 0 : i32
    %397 = tpu.memref_slice %arg4[%c9_i32_217, %c0_i32_221, %c0_i32_222] : memref<10x128x128xbf16, #tpu.memory_space<vmem>> -> memref<1x128x128xbf16, #tpu.memory_space<vmem>>
    %398 = tpu.memref_squeeze %397 : memref<1x128x128xbf16, #tpu.memory_space<vmem>> -> memref<128x128xbf16, #tpu.memory_space<vmem>>
    %399 = tpu.memref_slice %arg5[%c9_i32_218] : memref<10x!tpu.dma_semaphore, #tpu.memory_space<semaphore_mem>> -> memref<1x!tpu.dma_semaphore, #tpu.memory_space<semaphore_mem>>
    %400 = tpu.memref_squeeze %399 : memref<1x!tpu.dma_semaphore, #tpu.memory_space<semaphore_mem>> -> memref<!tpu.dma_semaphore, #tpu.memory_space<semaphore_mem>>
    tpu.wait_dma2 semaphore(%400 : memref<!tpu.dma_semaphore, #tpu.memory_space<semaphore_mem>>) src(%396 : memref<128x128xbf16, #tpu.memory_space<any>>) dst(%398 : memref<128x128xbf16, #tpu.memory_space<vmem>>)
    %401 = arith.truncf %394 : vector<8x128xf32> to vector<8x128xbf16>
    %c9 = arith.constant 9 : index
    %c0_223 = arith.constant 0 : index
    %c0_224 = arith.constant 0 : index
    %402 = vector.load %arg4[%c9, %c0_223, %c0_224] : memref<10x128x128xbf16, #tpu.memory_space<vmem>>, vector<1x128x128xbf16>
    %403 = vector.shape_cast %402 : vector<1x128x128xbf16> to vector<128x128xbf16>
    %cst_225 = arith.constant dense<0.000000e+00> : vector<8x128xf32>
    %404 = tpu.matmul %401, %403, %cst_225 {dimension_numbers = #tpu.dot_dimension_numbers<[1], [0], [0], [1], [0, 0, 1, 1], [], []>} : vector<8x128xbf16>, vector<128x128xbf16>, vector<8x128xf32> -> vector<8x128xf32>
    %405 = vector.extract_strided_slice %60 {offsets = [18, 0], sizes = [1, 128], strides = [1, 1]} : vector<19x128xf32> to vector<1x128xf32>
    %406 = vector.broadcast %405 : vector<1x128xf32> to vector<8x128xf32>
    %407 = arith.addf %404, %406 : vector<8x128xf32>
    %c0_226 = arith.constant 0 : index
    %c0_227 = arith.constant 0 : index
    %408 = vector.load %arg3[%c0_226, %c0_227] : memref<8x128xf32, #tpu.memory_space<vmem>>, vector<8x128xf32>
    tpu.vector_store %arg3[%c0_226, %c0_227], %407 {strides = array<i32>} : memref<8x128xf32, #tpu.memory_space<vmem>>, vector<8x128xf32>,
    return
  }
}

</mosaic_0001>

<llo_original>
// kernel: baseline_forward.1
$region0: #{baseline_forward.1}
  #allocation0 [shape = 'u32[]', space=smem, size = 0x4, offset = 0x4, fixed_abs, tag = 'smem constant byte address 0x4 - core index']
  #allocation1 [shape = 'u32[144,128]{1,0:T(1,128)}', space=vmem, size = 0x12000, scoped, tag = 'internal scratch']
  #allocation2 [shape = 'bf16[10,128,128]{2,1,0:T(16,128)(2,1)}', space=vmem, size = 0x50000, scoped, tag = 'scratch operand']
  #allocation3 [shape = 's32[10]{0}', space=sflag, size = 0x28, scoped, tag = 'scratch operand']
  #allocation10 [shape = 's32[]', space=sflag, size = 0x4, offset = 0, fixed_abs, tag = 'sflag constant byte address 0x0 - dummy sync flag']
  #allocation11 [shape = 's32[]', space=sflag, size = 0x4, offset = 0, fixed_abs, tag = 'sflag constant byte address 0x0 - dummy sync flag']
  #allocation12 [shape = 'u32[]', space=smem, size = 0x4, offset = 0x44, fixed_abs, tag = 'smem constant byte address 0x44 - assertion arg 0']
  #allocation13 [shape = 'u32[]', space=smem, size = 0x4, offset = 0x48, fixed_abs, tag = 'smem constant byte address 0x48 - assertion arg 1']
  #allocation14 [shape = 's32[]', space=sflag, size = 0x4, offset = 0, fixed_abs, tag = 'sflag constant byte address 0x0 - dummy sync flag']
  #allocation15 [shape = 's32[]', space=sflag, size = 0x4, offset = 0, fixed_abs, tag = 'sflag constant byte address 0x0 - dummy sync flag']
  #allocation16 [shape = 's32[]', space=sflag, size = 0x4, offset = 0, fixed_abs, tag = 'sflag constant byte address 0x0 - dummy sync flag']
  #allocation17 [shape = 's32[]', space=sflag, size = 0x4, offset = 0, fixed_abs, tag = 'sflag constant byte address 0x0 - dummy sync flag']
  #allocation18 [shape = 's32[]', space=sflag, size = 0x4, offset = 0, fixed_abs, tag = 'sflag constant byte address 0x0 - dummy sync flag']
  #allocation19 [shape = 's32[]', space=sflag, size = 0x4, offset = 0, fixed_abs, tag = 'sflag constant byte address 0x0 - dummy sync flag']
  #allocation20 [shape = 's32[]', space=sflag, size = 0x4, offset = 0, fixed_abs, tag = 'sflag constant byte address 0x0 - dummy sync flag']
  #allocation21 [shape = 's32[]', space=sflag, size = 0x4, offset = 0, fixed_abs, tag = 'sflag constant byte address 0x0 - dummy sync flag']
  #allocation22 [shape = 's32[]', space=sflag, size = 0x4, offset = 0, fixed_abs, tag = 'sflag constant byte address 0x0 - dummy sync flag']
  #allocation23 [shape = 's32[]', space=sflag, size = 0x4, offset = 0, fixed_abs, tag = 'sflag constant byte address 0x0 - dummy sync flag']
  #allocation24 [shape = 's32[]', space=sflag, size = 0x4, offset = 0, fixed_abs, tag = 'sflag constant byte address 0x0 - dummy sync flag']
  #allocation25 [shape = 's32[]', space=sflag, size = 0x4, offset = 0, fixed_abs, tag = 'sflag constant byte address 0x0 - dummy sync flag']
  #allocation26 [shape = 's32[]', space=sflag, size = 0x4, offset = 0, fixed_abs, tag = 'sflag constant byte address 0x0 - dummy sync flag']
  #allocation27 [shape = 's32[]', space=sflag, size = 0x4, offset = 0, fixed_abs, tag = 'sflag constant byte address 0x0 - dummy sync flag']
  #allocation28 [shape = 's32[]', space=sflag, size = 0x4, offset = 0, fixed_abs, tag = 'sflag constant byte address 0x0 - dummy sync flag']
  #allocation29 [shape = 's32[]', space=sflag, size = 0x4, offset = 0, fixed_abs, tag = 'sflag constant byte address 0x0 - dummy sync flag']
  #allocation30 [shape = 's32[]', space=sflag, size = 0x4, offset = 0, fixed_abs, tag = 'sflag constant byte address 0x0 - dummy sync flag']
  #allocation31 [shape = 's32[]', space=sflag, size = 0x4, offset = 0, fixed_abs, tag = 'sflag constant byte address 0x0 - dummy sync flag']
  %s0 = inlined_call_operand.hbm [shape: f32[8,32], index: 0, kind: input, shape index: {}]
  %s1 = inlined_call_operand.hbm [shape: bf16[10,128,128], index: 1, kind: input, shape index: {}]
  %s2 = inlined_call_operand.hbm [shape: f32[19,128], index: 2, kind: input, shape index: {}]
  %s3 = inlined_call_operand.hbm [shape: f32[8,128], index: 3, kind: output, shape index: {}]
  %s4 = sld [smem:[#allocation0]]
  $region66: #{baseline_forward.1} parent=0
    _
  %s6 = ssub.s32 1, %s4
  %s7 = scalar_select 0, %s6, %s4
  $region1: #{baseline_forward.1} parent=0
    #allocation4 [shape = 'u8[4096]{0}', space=vmem, size = 0x1000, scoped, tag = 'input window, operand 0, single buffered']
    #allocation5 [shape = 's32[1]{0}', space=sflag, size = 0x4, scoped, tag = 'scoped memory for baseline_forward.1']
    #allocation6 [shape = 's32[1]{0}', space=sflag, size = 0x4, scoped, tag = 'scoped memory for baseline_forward.1']
    #allocation7 [shape = 'u8[12288]{0}', space=vmem, size = 0x3000, scoped, tag = 'input window, operand 2, single buffered']
    #allocation8 [shape = 's32[1]{0}', space=sflag, size = 0x4, scoped, tag = 'scoped memory for baseline_forward.1']
    #allocation9 [shape = 'u8[4096]{0}', space=vmem, size = 0x1000, scoped, tag = 'output window, operand 0, single buffered']
    %8 = vsyncpa [#allocation5], 0
    %9 = vsyncpa [#allocation8], 0
    %10 = vsyncpa [#allocation6], 0
    // Predicated region
    $region2: #{baseline_forward.1} parent=1 // pred_check
      _
    $region3: #{baseline_forward.1} parent=1 // pred_check_branch
      %12 = sbr.rel (0) target = $region5
    $region4: #{baseline_forward.1} parent=1 // pred_region
      %s14 = ssub.s32 128, 128
      %15 = vsyncadd [#allocation5], %s14
      %s17 = sshll.u32 [#allocation4], 4
      %s18 = int_to_ptr.vmem [resolvable:$true] %s17
      %20 = dma.hbm_to_vmem [thread:$0]  %s0, 128, %s18, [#allocation5]
    $region5: #{baseline_forward.1} parent=1 // pred_fallthru
      _
    // Predicated region
    $region6: #{baseline_forward.1} parent=1 // pred_check
      _
    $region7: #{baseline_forward.1} parent=1 // pred_check_branch
      %22 = sbr.rel (0) target = $region9
    $region8: #{baseline_forward.1} parent=1 // pred_region
      %s24 = ssub.s32 384, 384
      %25 = vsyncadd [#allocation8], %s24
      %s26 = sshll.u32 [#allocation7], 4
      %s27 = int_to_ptr.vmem [resolvable:$true] %s26
      %32 = dma.hbm_to_vmem [thread:$0]  %s2, 384, %s27, [#allocation8], 128, 128, 8
    $region9: #{baseline_forward.1} parent=1 // pred_fallthru
      _
    // Predicated region
    $region10: #{baseline_forward.1} parent=1 // pred_check
      _
    $region11: #{baseline_forward.1} parent=1 // pred_check_branch
      %34 = sbr.rel (0) target = $region13
    $region12: #{baseline_forward.1} parent=1 // pred_region
      %35 = dma.done [#allocation5], 128
    $region13: #{baseline_forward.1} parent=1 // pred_fallthru
      _
    // Predicated region
    $region14: #{baseline_forward.1} parent=1 // pred_check
      _
    $region15: #{baseline_forward.1} parent=1 // pred_check_branch
      %37 = sbr.rel (0) target = $region17
    $region16: #{baseline_forward.1} parent=1 // pred_region
      %38 = dma.done [#allocation8], 384
    $region17: #{baseline_forward.1} parent=1 // pred_fallthru
      _
    // Predicated region
    $region18: #{baseline_forward.1} parent=1 // pred_check
      _
    $region19: #{baseline_forward.1} parent=1 // pred_check_branch
      %41 = sbr.rel target = $region21
    $region20: #{baseline_forward.1} parent=1 // pred_region
      %42 = sst [smem:[#allocation12]] [#allocation11]
      %43 = sst [smem:[#allocation13]] [#allocation10]
    $region21: #{baseline_forward.1} parent=1 // pred_fallthru
      _
    %45 = shalt.err (0)
    %s47 = sshll.u32 [#allocation2], 4
    %s48 = int_to_ptr.vmem [resolvable:$true] %s47
    %50 = dma.hbm_to_vmem [thread:$0]  %s1, 1024, %s48, [#allocation3]
    %s51 = scalar_lea.hbm %s1, 1024
    %s52 = scalar_lea.vmem [#allocation2], 64
    %s53 = scalar_lea.sflag [#allocation3], 1
    // Predicated region
    $region22: #{baseline_forward.1} parent=1 // pred_check
      _
    $region23: #{baseline_forward.1} parent=1 // pred_check_branch
      %55 = sbr.rel target = $region25
    $region24: #{baseline_forward.1} parent=1 // pred_region
      %56 = sst [smem:[#allocation12]] [#allocation15]
      %57 = sst [smem:[#allocation13]] [#allocation14]
    $region25: #{baseline_forward.1} parent=1 // pred_fallthru
      _
    %59 = shalt.err (0)
    %s61 = sshll.u32 %s52, 4
    %s62 = int_to_ptr.vmem [resolvable:$true] %s61
    %64 = dma.hbm_to_vmem [thread:$0]  %s51, 1024, %s62, %s53
    %s65 = scalar_lea.hbm %s1, 2048
    %s66 = scalar_lea.vmem [#allocation2], 128
    %s67 = scalar_lea.sflag [#allocation3], 2
    // Predicated region
    $region26: #{baseline_forward.1} parent=1 // pred_check
      _
    $region27: #{baseline_forward.1} parent=1 // pred_check_branch
      %69 = sbr.rel target = $region29
    $region28: #{baseline_forward.1} parent=1 // pred_region
      %70 = sst [smem:[#allocation12]] [#allocation17]
      %71 = sst [smem:[#allocation13]] [#allocation16]
    $region29: #{baseline_forward.1} parent=1 // pred_fallthru
      _
    %73 = shalt.err (0)
    %s75 = sshll.u32 %s66, 4
    %s76 = int_to_ptr.vmem [resolvable:$true] %s75
    %78 = dma.hbm_to_vmem [thread:$0]  %s65, 1024, %s76, %s67
    %s79 = scalar_lea.hbm %s1, 3072
    %s80 = scalar_lea.vmem [#allocation2], 192
    %s81 = scalar_lea.sflag [#allocation3], 3
    // Predicated region
    $region30: #{baseline_forward.1} parent=1 // pred_check
      _
    $region31: #{baseline_forward.1} parent=1 // pred_check_branch
      %83 = sbr.rel target = $region33
    $region32: #{baseline_forward.1} parent=1 // pred_region
      %84 = sst [smem:[#allocation12]] [#allocation19]
      %85 = sst [smem:[#allocation13]] [#allocation18]
    $region33: #{baseline_forward.1} parent=1 // pred_fallthru
      _
    %87 = shalt.err (0)
    %s89 = sshll.u32 %s80, 4
    %s90 = int_to_ptr.vmem [resolvable:$true] %s89
    %92 = dma.hbm_to_vmem [thread:$0]  %s79, 1024, %s90, %s81
    %s93 = scalar_lea.hbm %s1, 4096
    %s94 = scalar_lea.vmem [#allocation2], 256
    %s95 = scalar_lea.sflag [#allocation3], 4
    // Predicated region
    $region34: #{baseline_forward.1} parent=1 // pred_check
      _
    $region35: #{baseline_forward.1} parent=1 // pred_check_branch
      %97 = sbr.rel target = $region37
    $region36: #{baseline_forward.1} parent=1 // pred_region
      %98 = sst [smem:[#allocation12]] [#allocation21]
      %99 = sst [smem:[#allocation13]] [#allocation20]
    $region37: #{baseline_forward.1} parent=1 // pred_fallthru
      _
    %101 = shalt.err (0)
    %s103 = sshll.u32 %s94, 4
    %s104 = int_to_ptr.vmem [resolvable:$true] %s103
    %106 = dma.hbm_to_vmem [thread:$0]  %s93, 1024, %s104, %s95
    %s107 = scalar_lea.hbm %s1, 5120
    %s108 = scalar_lea.vmem [#allocation2], 320
    %s109 = scalar_lea.sflag [#allocation3], 5
    // Predicated region
    $region38: #{baseline_forward.1} parent=1 // pred_check
      _
    $region39: #{baseline_forward.1} parent=1 // pred_check_branch
      %111 = sbr.rel target = $region41
    $region40: #{baseline_forward.1} parent=1 // pred_region
      %112 = sst [smem:[#allocation12]] [#allocation23]
      %113 = sst [smem:[#allocation13]] [#allocation22]
    $region41: #{baseline_forward.1} parent=1 // pred_fallthru
      _
    %115 = shalt.err (0)
    %s117 = sshll.u32 %s108, 4
    %s118 = int_to_ptr.vmem [resolvable:$true] %s117
    %120 = dma.hbm_to_vmem [thread:$0]  %s107, 1024, %s118, %s109
    %s121 = scalar_lea.hbm %s1, 6144
    %s122 = scalar_lea.vmem [#allocation2], 384
    %s123 = scalar_lea.sflag [#allocation3], 6
    // Predicated region
    $region42: #{baseline_forward.1} parent=1 // pred_check
      _
    $region43: #{baseline_forward.1} parent=1 // pred_check_branch
      %125 = sbr.rel target = $region45
    $region44: #{baseline_forward.1} parent=1 // pred_region
      %126 = sst [smem:[#allocation12]] [#allocation25]
      %127 = sst [smem:[#allocation13]] [#allocation24]
    $region45: #{baseline_forward.1} parent=1 // pred_fallthru
      _
    %129 = shalt.err (0)
    %s131 = sshll.u32 %s122, 4
    %s132 = int_to_ptr.vmem [resolvable:$true] %s131
    %134 = dma.hbm_to_vmem [thread:$0]  %s121, 1024, %s132, %s123
    %s135 = scalar_lea.hbm %s1, 7168
    %s136 = scalar_lea.vmem [#allocation2], 448
    %s137 = scalar_lea.sflag [#allocation3], 7
    // Predicated region
    $region46: #{baseline_forward.1} parent=1 // pred_check
      _
    $region47: #{baseline_forward.1} parent=1 // pred_check_branch
      %139 = sbr.rel target = $region49
    $region48: #{baseline_forward.1} parent=1 // pred_region
      %140 = sst [smem:[#allocation12]] [#allocation27]
      %141 = sst [smem:[#allocation13]] [#allocation26]
    $region49: #{baseline_forward.1} parent=1 // pred_fallthru
      _
    %143 = shalt.err (0)
    %s145 = sshll.u32 %s136, 4
    %s146 = int_to_ptr.vmem [resolvable:$true] %s145
    %148 = dma.hbm_to_vmem [thread:$0]  %s135, 1024, %s146, %s137
    %s149 = scalar_lea.hbm %s1, 8192
    %s150 = scalar_lea.vmem [#allocation2], 512
    %s151 = scalar_lea.sflag [#allocation3], 8
    // Predicated region
    $region50: #{baseline_forward.1} parent=1 // pred_check
      _
    $region51: #{baseline_forward.1} parent=1 // pred_check_branch
      %153 = sbr.rel target = $region53
    $region52: #{baseline_forward.1} parent=1 // pred_region
      %154 = sst [smem:[#allocation12]] [#allocation29]
      %155 = sst [smem:[#allocation13]] [#allocation28]
    $region53: #{baseline_forward.1} parent=1 // pred_fallthru
      _
    %157 = shalt.err (0)
    %s159 = sshll.u32 %s150, 4
    %s160 = int_to_ptr.vmem [resolvable:$true] %s159
    %162 = dma.hbm_to_vmem [thread:$0]  %s149, 1024, %s160, %s151
    %s163 = scalar_lea.hbm %s1, 9216
    %s164 = scalar_lea.vmem [#allocation2], 576
    %s165 = scalar_lea.sflag [#allocation3], 9
    // Predicated region
    $region54: #{baseline_forward.1} parent=1 // pred_check
      _
    $region55: #{baseline_forward.1} parent=1 // pred_check_branch
      %167 = sbr.rel target = $region57
    $region56: #{baseline_forward.1} parent=1 // pred_region
      %168 = sst [smem:[#allocation12]] [#allocation31]
      %169 = sst [smem:[#allocation13]] [#allocation30]
    $region57: #{baseline_forward.1} parent=1 // pred_fallthru
      _
    %171 = shalt.err (0)
    %s173 = sshll.u32 %s164, 4
    %s174 = int_to_ptr.vmem [resolvable:$true] %s173
    %176 = dma.hbm_to_vmem [thread:$0]  %s163, 1024, %s174, %s165
    %v177 = vld [vmem:[#allocation7] sm:$0xff]
    %v178 = vld [vmem:[#allocation7 + $0x8] sm:$0xff]
    %v179 = vld [vmem:[#allocation7 + $0x10] sm:$0x7]
    %v180 = vld [vmem:[#allocation4] sm:$0xff]
    %s181 = smul.u32 4, 16
    %s182 = smul.u32 %s181, 1
    %s183 = sshll.u32 %s182, 4
    %184 = dma.done [#allocation3], %s183
    %v185 = vld [vmem:[#allocation2] sm:$0xff]
    %v186 = vld [vmem:[#allocation2 + $0x8] sm:$0xff]
    %v187 = vpack.c.bf16 %v180, %v180
    %vm188 = vcmask 261120
    %v190 = vsel %vm188, %v187, 0
    %192 = vmatprep.subr.bf16.mxu0 0
    %193 = vmatpush1.bf16.msra.mxu0 %v185
    %194 = vmatprep.subr.bf16.mxu0 0
    %195 = vmatpush1.bf16.msra.mxu0 %v186
    %196 = vmatprep.subr.bf16.mxu0 0
    %197 = vmatpush1.bf16.msra.mxu0 0
    %198 = vmatprep.subr.bf16.mxu0 0
    %199 = vmatpush1.bf16.msra.mxu0 0
    %200 = vmatprep.subr.bf16.mxu0 0
    %201 = vmatpush1.bf16.msra.mxu0 0
    %202 = vmatprep.subr.bf16.mxu0 0
    %203 = vmatpush1.bf16.msra.mxu0 0
    %204 = vmatprep.subr.bf16.mxu0 0
    %205 = vmatpush1.bf16.msra.mxu0 0
    %206 = vmatprep.subr.bf16.mxu0 0
    %207 = vmatpush1.bf16.msra.mxu0 0
    %208 = vmatprep.subr.bf16.mxu0 0
    %209 = vmatpush1.bf16.msra.mxu0 0
    %210 = vmatprep.subr.bf16.mxu0 0
    %211 = vmatpush1.bf16.msra.mxu0 0
    %212 = vmatprep.subr.bf16.mxu0 0
    %213 = vmatpush1.bf16.msra.mxu0 0
    %214 = vmatprep.subr.bf16.mxu0 0
    %215 = vmatpush1.bf16.msra.mxu0 0
    %216 = vmatprep.subr.bf16.mxu0 0
    %217 = vmatpush1.bf16.msra.mxu0 0
    %218 = vmatprep.subr.bf16.mxu0 0
    %219 = vmatpush1.bf16.msra.mxu0 0
    %220 = vmatprep.subr.bf16.mxu0 0
    %221 = vmatpush1.bf16.msra.mxu0 0
    %222 = vmatprep.subr.bf16.mxu0 0
    %223 = vmatpush1.bf16.msra.mxu0 0
    %224 = vmatprep.mubr.bf16.mxu0 0
    %225 = vmatmul.mubr.bf16.gmra.mrb[0].mxu0 %v190
    %v226 = vpop.f32.mrb[0].mxu0
    %v227 = vadd.f32 0.0, %v226
    %v228 = vpop.f32.mrb[0].mxu0
    %v229 = vpop.f32.mrb[0].mxu0
    %v230 = vpop.f32.mrb[0].mxu0
    %231 = vdwg.mxu0
    %v232 = vrot.slane %v227, 4
    %v233 = vadd.f32 %v227, %v232
    %v234 = vrot.slane %v233, 2
    %v235 = vadd.f32 %v233, %v234
    %v236 = vrot.slane %v235, 1
    %v237 = vadd.f32 %v235, %v236
    %v238 = vrcp.pop 8.0
    %v239 = vmul.f32 %v237, %v238
    %v240 = vmul.f32 %v227, %v227
    %v241 = vrot.slane %v240, 4
    %v242 = vadd.f32 %v240, %v241
    %v243 = vrot.slane %v242, 2
    %v244 = vadd.f32 %v242, %v243
    %v245 = vrot.slane %v244, 1
    %v246 = vadd.f32 %v244, %v245
    %v247 = vmul.f32 %v246, %v238
    %v248 = vmul.f32 %v239, %v239
    %v249 = vsub.f32 %v247, %v248
    %v250 = vmax.f32 %v249, 0.0
    %v251 = vadd.f32 %v250, 1e-05
    %v252 = vrsqrt.pop %v251
    %v253 = vmul.f32 %v177, %v252
    %v254 = vmul.f32 %v239, %v253
    %v256 = vrot.slane %v254, 7
    %v258 = vsub.f32 %v178, %v256
    %v259 = vlaneseq
    %v260 = vshrl.u32 %v259, 7
    %v261 = vsub.s32 0, %v260
    %v262 = vrot.slane %v253, %v261
    %v263 = vmul.f32 %v227, %v262
    %v264 = vlaneseq
    %v265 = vshrl.u32 %v264, 7
    %v266 = vsub.s32 1, %v265
    %v267 = vrot.slane %v258, %v266
    %v268 = vadd.f32 %v263, %v267
    %v269 = vmax.f32 %v268, 0.0
    %s270 = sshll.u32 %s182, 4
    %271 = dma.done %s53, %s270
    %v272 = vld [vmem:[%s52] sm:$0xff]
    %v273 = vld [vmem:[%s52 + $0x8] sm:$0xff]
    %v274 = vld [vmem:[%s52 + $0x10] sm:$0xff]
    %v275 = vld [vmem:[%s52 + $0x18] sm:$0xff]
    %v276 = vld [vmem:[%s52 + $0x20] sm:$0xff]
    %v277 = vld [vmem:[%s52 + $0x28] sm:$0xff]
    %v278 = vld [vmem:[%s52 + $0x30] sm:$0xff]
    %v279 = vld [vmem:[%s52 + $0x38] sm:$0xff]
    %v280 = vpack.c.bf16 %v269, %v269
    %281 = vmatprep.subr.bf16.mxu0 0
    %282 = vmatpush1.bf16.msra.mxu0 %v272
    %283 = vmatprep.subr.bf16.mxu0 0
    %284 = vmatpush1.bf16.msra.mxu0 %v273
    %285 = vmatprep.subr.bf16.mxu0 0
    %286 = vmatpush1.bf16.msra.mxu0 %v274
    %287 = vmatprep.subr.bf16.mxu0 0
    %288 = vmatpush1.bf16.msra.mxu0 %v275
    %289 = vmatprep.subr.bf16.mxu0 0
    %290 = vmatpush1.bf16.msra.mxu0 %v276
    %291 = vmatprep.subr.bf16.mxu0 0
    %292 = vmatpush1.bf16.msra.mxu0 %v277
    %293 = vmatprep.subr.bf16.mxu0 0
    %294 = vmatpush1.bf16.msra.mxu0 %v278
    %295 = vmatprep.subr.bf16.mxu0 0
    %296 = vmatpush1.bf16.msra.mxu0 %v279
    %297 = vmatprep.subr.bf16.mxu0 0
    %298 = vmatpush1.bf16.msra.mxu0 0
    %299 = vmatprep.subr.bf16.mxu0 0
    %300 = vmatpush1.bf16.msra.mxu0 0
    %301 = vmatprep.subr.bf16.mxu0 0
    %302 = vmatpush1.bf16.msra.mxu0 0
    %303 = vmatprep.subr.bf16.mxu0 0
    %304 = vmatpush1.bf16.msra.mxu0 0
    %305 = vmatprep.subr.bf16.mxu0 0
    %306 = vmatpush1.bf16.msra.mxu0 0
    %307 = vmatprep.subr.bf16.mxu0 0
    %308 = vmatpush1.bf16.msra.mxu0 0
    %309 = vmatprep.subr.bf16.mxu0 0
    %310 = vmatpush1.bf16.msra.mxu0 0
    %311 = vmatprep.subr.bf16.mxu0 0
    %312 = vmatpush1.bf16.msra.mxu0 0
    %313 = vmatprep.mubr.bf16.mxu0 0
    %314 = vmatmul.mubr.bf16.gmra.mrb[0].mxu0 %v280
    %v315 = vpop.f32.mrb[0].mxu0
    %v316 = vadd.f32 0.0, %v315
    %v317 = vpop.f32.mrb[0].mxu0
    %v318 = vpop.f32.mrb[0].mxu0
    %v319 = vpop.f32.mrb[0].mxu0
    %320 = vdwg.mxu0
    %v321 = vrot.slane %v316, 4
    %v322 = vadd.f32 %v316, %v321
    %v323 = vrot.slane %v322, 2
    %v324 = vadd.f32 %v322, %v323
    %v325 = vrot.slane %v324, 1
    %v326 = vadd.f32 %v324, %v325
    %v327 = vmul.f32 %v326, %v238
    %v328 = vmul.f32 %v316, %v316
    %v329 = vrot.slane %v328, 4
    %v330 = vadd.f32 %v328, %v329
    %v331 = vrot.slane %v330, 2
    %v332 = vadd.f32 %v330, %v331
    %v333 = vrot.slane %v332, 1
    %v334 = vadd.f32 %v332, %v333
    %v335 = vmul.f32 %v334, %v238
    %v336 = vmul.f32 %v327, %v327
    %v337 = vsub.f32 %v335, %v336
    %v338 = vmax.f32 %v337, 0.0
    %v339 = vadd.f32 %v338, 1e-05
    %v340 = vrsqrt.pop %v339
    %v341 = vmul.f32 %v177, %v340
    %v342 = vmul.f32 %v327, %v341
    %v344 = vrot.slane %v342, 7
    %v346 = vsub.f32 %v178, %v344
    %v347 = vlaneseq
    %v348 = vshrl.u32 %v347, 7
    %v349 = vsub.s32 1, %v348
    %v350 = vrot.slane %v341, %v349
    %v351 = vmul.f32 %v316, %v350
    %v352 = vlaneseq
    %v353 = vshrl.u32 %v352, 7
    %v354 = vsub.s32 2, %v353
    %v355 = vrot.slane %v346, %v354
    %v356 = vadd.f32 %v351, %v355
    %v357 = vmax.f32 %v356, 0.0
    %s358 = sshll.u32 %s182, 4
    %359 = dma.done %s67, %s358
    %v360 = vld [vmem:[%s66] sm:$0xff]
    %v361 = vld [vmem:[%s66 + $0x8] sm:$0xff]
    %v362 = vld [vmem:[%s66 + $0x10] sm:$0xff]
    %v363 = vld [vmem:[%s66 + $0x18] sm:$0xff]
    %v364 = vld [vmem:[%s66 + $0x20] sm:$0xff]
    %v365 = vld [vmem:[%s66 + $0x28] sm:$0xff]
    %v366 = vld [vmem:[%s66 + $0x30] sm:$0xff]
    %v367 = vld [vmem:[%s66 + $0x38] sm:$0xff]
    %v368 = vpack.c.bf16 %v357, %v357
    %369 = vmatprep.subr.bf16.mxu0 0
    %370 = vmatpush1.bf16.msra.mxu0 %v360
    %371 = vmatprep.subr.bf16.mxu0 0
    %372 = vmatpush1.bf16.msra.mxu0 %v361
    %373 = vmatprep.subr.bf16.mxu0 0
    %374 = vmatpush1.bf16.msra.mxu0 %v362
    %375 = vmatprep.subr.bf16.mxu0 0
    %376 = vmatpush1.bf16.msra.mxu0 %v363
    %377 = vmatprep.subr.bf16.mxu0 0
    %378 = vmatpush1.bf16.msra.mxu0 %v364
    %379 = vmatprep.subr.bf16.mxu0 0
    %380 = vmatpush1.bf16.msra.mxu0 %v365
    %381 = vmatprep.subr.bf16.mxu0 0
    %382 = vmatpush1.bf16.msra.mxu0 %v366
    %383 = vmatprep.subr.bf16.mxu0 0
    %384 = vmatpush1.bf16.msra.mxu0 %v367
    %385 = vmatprep.subr.bf16.mxu0 0
    %386 = vmatpush1.bf16.msra.mxu0 0
    %387 = vmatprep.subr.bf16.mxu0 0
    %388 = vmatpush1.bf16.msra.mxu0 0
    %389 = vmatprep.subr.bf16.mxu0 0
    %390 = vmatpush1.bf16.msra.mxu0 0
    %391 = vmatprep.subr.bf16.mxu0 0
    %392 = vmatpush1.bf16.msra.mxu0 0
    %393 = vmatprep.subr.bf16.mxu0 0
    %394 = vmatpush1.bf16.msra.mxu0 0
    %395 = vmatprep.subr.bf16.mxu0 0
    %396 = vmatpush1.bf16.msra.mxu0 0
    %397 = vmatprep.subr.bf16.mxu0 0
    %398 = vmatpush1.bf16.msra.mxu0 0
    %399 = vmatprep.subr.bf16.mxu0 0
    %400 = vmatpush1.bf16.msra.mxu0 0
    %401 = vmatprep.mubr.bf16.mxu0 0
    %402 = vmatmul.mubr.bf16.gmra.mrb[0].mxu0 %v368
    %v403 = vpop.f32.mrb[0].mxu0
    %v404 = vadd.f32 0.0, %v403
    %v405 = vpop.f32.mrb[0].mxu0
    %v406 = vpop.f32.mrb[0].mxu0
    %v407 = vpop.f32.mrb[0].mxu0
    %408 = vdwg.mxu0
    %v409 = vrot.slane %v404, 4
    %v410 = vadd.f32 %v404, %v409
    %v411 = vrot.slane %v410, 2
    %v412 = vadd.f32 %v410, %v411
    %v413 = vrot.slane %v412, 1
    %v414 = vadd.f32 %v412, %v413
    %v415 = vmul.f32 %v414, %v238
    %v416 = vmul.f32 %v404, %v404
    %v417 = vrot.slane %v416, 4
    %v418 = vadd.f32 %v416, %v417
    %v419 = vrot.slane %v418, 2
    %v420 = vadd.f32 %v418, %v419
    %v421 = vrot.slane %v420, 1
    %v422 = vadd.f32 %v420, %v421
    %v423 = vmul.f32 %v422, %v238
    %v424 = vmul.f32 %v415, %v415
    %v425 = vsub.f32 %v423, %v424
    %v426 = vmax.f32 %v425, 0.0
    %v427 = vadd.f32 %v426, 1e-05
    %v428 = vrsqrt.pop %v427
    %v429 = vmul.f32 %v177, %v428
    %v430 = vmul.f32 %v415, %v429
    %v432 = vrot.slane %v430, 7
    %v434 = vsub.f32 %v178, %v432
    %v435 = vlaneseq
    %v436 = vshrl.u32 %v435, 7
    %v437 = vsub.s32 2, %v436
    %v438 = vrot.slane %v429, %v437
    %v439 = vmul.f32 %v404, %v438
    %v440 = vlaneseq
    %v441 = vshrl.u32 %v440, 7
    %v442 = vsub.s32 3, %v441
    %v443 = vrot.slane %v434, %v442
    %v444 = vadd.f32 %v439, %v443
    %v445 = vmax.f32 %v444, 0.0
    %s446 = sshll.u32 %s182, 4
    %447 = dma.done %s81, %s446
    %v448 = vld [vmem:[%s80] sm:$0xff]
    %v449 = vld [vmem:[%s80 + $0x8] sm:$0xff]
    %v450 = vld [vmem:[%s80 + $0x10] sm:$0xff]
    %v451 = vld [vmem:[%s80 + $0x18] sm:$0xff]
    %v452 = vld [vmem:[%s80 + $0x20] sm:$0xff]
    %v453 = vld [vmem:[%s80 + $0x28] sm:$0xff]
    %v454 = vld [vmem:[%s80 + $0x30] sm:$0xff]
    %v455 = vld [vmem:[%s80 + $0x38] sm:$0xff]
    %v456 = vpack.c.bf16 %v445, %v445
    %457 = vmatprep.subr.bf16.mxu0 0
    %458 = vmatpush1.bf16.msra.mxu0 %v448
    %459 = vmatprep.subr.bf16.mxu0 0
    %460 = vmatpush1.bf16.msra.mxu0 %v449
    %461 = vmatprep.subr.bf16.mxu0 0
    %462 = vmatpush1.bf16.msra.mxu0 %v450
    %463 = vmatprep.subr.bf16.mxu0 0
    %464 = vmatpush1.bf16.msra.mxu0 %v451
    %465 = vmatprep.subr.bf16.mxu0 0
    %466 = vmatpush1.bf16.msra.mxu0 %v452
    %467 = vmatprep.subr.bf16.mxu0 0
    %468 = vmatpush1.bf16.msra.mxu0 %v453
    %469 = vmatprep.subr.bf16.mxu0 0
    %470 = vmatpush1.bf16.msra.mxu0 %v454
    %471 = vmatprep.subr.bf16.mxu0 0
    %472 = vmatpush1.bf16.msra.mxu0 %v455
    %473 = vmatprep.subr.bf16.mxu0 0
    %474 = vmatpush1.bf16.msra.mxu0 0
    %475 = vmatprep.subr.bf16.mxu0 0
    %476 = vmatpush1.bf16.msra.mxu0 0
    %477 = vmatprep.subr.bf16.mxu0 0
    %478 = vmatpush1.bf16.msra.mxu0 0
    %479 = vmatprep.subr.bf16.mxu0 0
    %480 = vmatpush1.bf16.msra.mxu0 0
    %481 = vmatprep.subr.bf16.mxu0 0
    %482 = vmatpush1.bf16.msra.mxu0 0
    %483 = vmatprep.subr.bf16.mxu0 0
    %484 = vmatpush1.bf16.msra.mxu0 0
    %485 = vmatprep.subr.bf16.mxu0 0
    %486 = vmatpush1.bf16.msra.mxu0 0
    %487 = vmatprep.subr.bf16.mxu0 0
    %488 = vmatpush1.bf16.msra.mxu0 0
    %489 = vmatprep.mubr.bf16.mxu0 0
    %490 = vmatmul.mubr.bf16.gmra.mrb[0].mxu0 %v456
    %v491 = vpop.f32.mrb[0].mxu0
    %v492 = vadd.f32 0.0, %v491
    %v493 = vpop.f32.mrb[0].mxu0
    %v494 = vpop.f32.mrb[0].mxu0
    %v495 = vpop.f32.mrb[0].mxu0
    %496 = vdwg.mxu0
    %v497 = vrot.slane %v492, 4
    %v498 = vadd.f32 %v492, %v497
    %v499 = vrot.slane %v498, 2
    %v500 = vadd.f32 %v498, %v499
    %v501 = vrot.slane %v500, 1
    %v502 = vadd.f32 %v500, %v501
    %v503 = vmul.f32 %v502, %v238
    %v504 = vmul.f32 %v492, %v492
    %v505 = vrot.slane %v504, 4
    %v506 = vadd.f32 %v504, %v505
    %v507 = vrot.slane %v506, 2
    %v508 = vadd.f32 %v506, %v507
    %v509 = vrot.slane %v508, 1
    %v510 = vadd.f32 %v508, %v509
    %v511 = vmul.f32 %v510, %v238
    %v512 = vmul.f32 %v503, %v503
    %v513 = vsub.f32 %v511, %v512
    %v514 = vmax.f32 %v513, 0.0
    %v515 = vadd.f32 %v514, 1e-05
    %v516 = vrsqrt.pop %v515
    %v517 = vmul.f32 %v177, %v516
    %v518 = vmul.f32 %v503, %v517
    %v520 = vrot.slane %v518, 7
    %v522 = vsub.f32 %v178, %v520
    %v523 = vlaneseq
    %v524 = vshrl.u32 %v523, 7
    %v525 = vsub.s32 3, %v524
    %v526 = vrot.slane %v517, %v525
    %v527 = vmul.f32 %v492, %v526
    %v528 = vlaneseq
    %v529 = vshrl.u32 %v528, 7
    %v530 = vsub.s32 4, %v529
    %v531 = vrot.slane %v522, %v530
    %v532 = vadd.f32 %v527, %v531
    %v533 = vmax.f32 %v532, 0.0
    %s534 = sshll.u32 %s182, 4
    %535 = dma.done %s95, %s534
    %v536 = vld [vmem:[%s94] sm:$0xff]
    %v537 = vld [vmem:[%s94 + $0x8] sm:$0xff]
    %v538 = vld [vmem:[%s94 + $0x10] sm:$0xff]
    %v539 = vld [vmem:[%s94 + $0x18] sm:$0xff]
    %v540 = vld [vmem:[%s94 + $0x20] sm:$0xff]
    %v541 = vld [vmem:[%s94 + $0x28] sm:$0xff]
    %v542 = vld [vmem:[%s94 + $0x30] sm:$0xff]
    %v543 = vld [vmem:[%s94 + $0x38] sm:$0xff]
    %v544 = vpack.c.bf16 %v533, %v533
    %545 = vmatprep.subr.bf16.mxu0 0
    %546 = vmatpush1.bf16.msra.mxu0 %v536
    %547 = vmatprep.subr.bf16.mxu0 0
    %548 = vmatpush1.bf16.msra.mxu0 %v537
    %549 = vmatprep.subr.bf16.mxu0 0
    %550 = vmatpush1.bf16.msra.mxu0 %v538
    %551 = vmatprep.subr.bf16.mxu0 0
    %552 = vmatpush1.bf16.msra.mxu0 %v539
    %553 = vmatprep.subr.bf16.mxu0 0
    %554 = vmatpush1.bf16.msra.mxu0 %v540
    %555 = vmatprep.subr.bf16.mxu0 0
    %556 = vmatpush1.bf16.msra.mxu0 %v541
    %557 = vmatprep.subr.bf16.mxu0 0
    %558 = vmatpush1.bf16.msra.mxu0 %v542
    %559 = vmatprep.subr.bf16.mxu0 0
    %560 = vmatpush1.bf16.msra.mxu0 %v543
    %561 = vmatprep.subr.bf16.mxu0 0
    %562 = vmatpush1.bf16.msra.mxu0 0
    %563 = vmatprep.subr.bf16.mxu0 0
    %564 = vmatpush1.bf16.msra.mxu0 0
    %565 = vmatprep.subr.bf16.mxu0 0
    %566 = vmatpush1.bf16.msra.mxu0 0
    %567 = vmatprep.subr.bf16.mxu0 0
    %568 = vmatpush1.bf16.msra.mxu0 0
    %569 = vmatprep.subr.bf16.mxu0 0
    %570 = vmatpush1.bf16.msra.mxu0 0
    %571 = vmatprep.subr.bf16.mxu0 0
    %572 = vmatpush1.bf16.msra.mxu0 0
    %573 = vmatprep.subr.bf16.mxu0 0
    %574 = vmatpush1.bf16.msra.mxu0 0
    %575 = vmatprep.subr.bf16.mxu0 0
    %576 = vmatpush1.bf16.msra.mxu0 0
    %577 = vmatprep.mubr.bf16.mxu0 0
    %578 = vmatmul.mubr.bf16.gmra.mrb[0].mxu0 %v544
    %v579 = vpop.f32.mrb[0].mxu0
    %v580 = vadd.f32 0.0, %v579
    %v581 = vpop.f32.mrb[0].mxu0
    %v582 = vpop.f32.mrb[0].mxu0
    %v583 = vpop.f32.mrb[0].mxu0
    %584 = vdwg.mxu0
    %v585 = vrot.slane %v580, 4
    %v586 = vadd.f32 %v580, %v585
    %v587 = vrot.slane %v586, 2
    %v588 = vadd.f32 %v586, %v587
    %v589 = vrot.slane %v588, 1
    %v590 = vadd.f32 %v588, %v589
    %v591 = vmul.f32 %v590, %v238
    %v592 = vmul.f32 %v580, %v580
    %v593 = vrot.slane %v592, 4
    %v594 = vadd.f32 %v592, %v593
    %v595 = vrot.slane %v594, 2
    %v596 = vadd.f32 %v594, %v595
    %v597 = vrot.slane %v596, 1
    %v598 = vadd.f32 %v596, %v597
    %v599 = vmul.f32 %v598, %v238
    %v600 = vmul.f32 %v591, %v591
    %v601 = vsub.f32 %v599, %v600
    %v602 = vmax.f32 %v601, 0.0
    %v603 = vadd.f32 %v602, 1e-05
    %v604 = vrsqrt.pop %v603
    %v605 = vmul.f32 %v177, %v604
    %v606 = vmul.f32 %v591, %v605
    %v608 = vrot.slane %v606, 7
    %v610 = vsub.f32 %v178, %v608
    %v611 = vlaneseq
    %v612 = vshrl.u32 %v611, 7
    %v613 = vsub.s32 4, %v612
    %v614 = vrot.slane %v605, %v613
    %v615 = vmul.f32 %v580, %v614
    %v616 = vlaneseq
    %v617 = vshrl.u32 %v616, 7
    %v618 = vsub.s32 5, %v617
    %v619 = vrot.slane %v610, %v618
    %v620 = vadd.f32 %v615, %v619
    %v621 = vmax.f32 %v620, 0.0
    %s622 = sshll.u32 %s182, 4
    %623 = dma.done %s109, %s622
    %v624 = vld [vmem:[%s108] sm:$0xff]
    %v625 = vld [vmem:[%s108 + $0x8] sm:$0xff]
    %v626 = vld [vmem:[%s108 + $0x10] sm:$0xff]
    %v627 = vld [vmem:[%s108 + $0x18] sm:$0xff]
    %v628 = vld [vmem:[%s108 + $0x20] sm:$0xff]
    %v629 = vld [vmem:[%s108 + $0x28] sm:$0xff]
    %v630 = vld [vmem:[%s108 + $0x30] sm:$0xff]
    %v631 = vld [vmem:[%s108 + $0x38] sm:$0xff]
    %v632 = vpack.c.bf16 %v621, %v621
    %633 = vmatprep.subr.bf16.mxu0 0
    %634 = vmatpush1.bf16.msra.mxu0 %v624
    %635 = vmatprep.subr.bf16.mxu0 0
    %636 = vmatpush1.bf16.msra.mxu0 %v625
    %637 = vmatprep.subr.bf16.mxu0 0
    %638 = vmatpush1.bf16.msra.mxu0 %v626
    %639 = vmatprep.subr.bf16.mxu0 0
    %640 = vmatpush1.bf16.msra.mxu0 %v627
    %641 = vmatprep.subr.bf16.mxu0 0
    %642 = vmatpush1.bf16.msra.mxu0 %v628
    %643 = vmatprep.subr.bf16.mxu0 0
    %644 = vmatpush1.bf16.msra.mxu0 %v629
    %645 = vmatprep.subr.bf16.mxu0 0
    %646 = vmatpush1.bf16.msra.mxu0 %v630
    %647 = vmatprep.subr.bf16.mxu0 0
    %648 = vmatpush1.bf16.msra.mxu0 %v631
    %649 = vmatprep.subr.bf16.mxu0 0
    %650 = vmatpush1.bf16.msra.mxu0 0
    %651 = vmatprep.subr.bf16.mxu0 0
    %652 = vmatpush1.bf16.msra.mxu0 0
    %653 = vmatprep.subr.bf16.mxu0 0
    %654 = vmatpush1.bf16.msra.mxu0 0
    %655 = vmatprep.subr.bf16.mxu0 0
    %656 = vmatpush1.bf16.msra.mxu0 0
    %657 = vmatprep.subr.bf16.mxu0 0
    %658 = vmatpush1.bf16.msra.mxu0 0
    %659 = vmatprep.subr.bf16.mxu0 0
    %660 = vmatpush1.bf16.msra.mxu0 0
    %661 = vmatprep.subr.bf16.mxu0 0
    %662 = vmatpush1.bf16.msra.mxu0 0
    %663 = vmatprep.subr.bf16.mxu0 0
    %664 = vmatpush1.bf16.msra.mxu0 0
    %665 = vmatprep.mubr.bf16.mxu0 0
    %666 = vmatmul.mubr.bf16.gmra.mrb[0].mxu0 %v632
    %v667 = vpop.f32.mrb[0].mxu0
    %v668 = vadd.f32 0.0, %v667
    %v669 = vpop.f32.mrb[0].mxu0
    %v670 = vpop.f32.mrb[0].mxu0
    %v671 = vpop.f32.mrb[0].mxu0
    %672 = vdwg.mxu0
    %v673 = vrot.slane %v668, 4
    %v674 = vadd.f32 %v668, %v673
    %v675 = vrot.slane %v674, 2
    %v676 = vadd.f32 %v674, %v675
    %v677 = vrot.slane %v676, 1
    %v678 = vadd.f32 %v676, %v677
    %v679 = vmul.f32 %v678, %v238
    %v680 = vmul.f32 %v668, %v668
    %v681 = vrot.slane %v680, 4
    %v682 = vadd.f32 %v680, %v681
    %v683 = vrot.slane %v682, 2
    %v684 = vadd.f32 %v682, %v683
    %v685 = vrot.slane %v684, 1
    %v686 = vadd.f32 %v684, %v685
    %v687 = vmul.f32 %v686, %v238
    %v688 = vmul.f32 %v679, %v679
    %v689 = vsub.f32 %v687, %v688
    %v690 = vmax.f32 %v689, 0.0
    %v691 = vadd.f32 %v690, 1e-05
    %v692 = vrsqrt.pop %v691
    %v693 = vmul.f32 %v177, %v692
    %v694 = vmul.f32 %v679, %v693
    %v696 = vrot.slane %v694, 7
    %v698 = vsub.f32 %v178, %v696
    %v699 = vlaneseq
    %v700 = vshrl.u32 %v699, 7
    %v701 = vsub.s32 5, %v700
    %v702 = vrot.slane %v693, %v701
    %v703 = vmul.f32 %v668, %v702
    %v704 = vlaneseq
    %v705 = vshrl.u32 %v704, 7
    %v706 = vsub.s32 6, %v705
    %v707 = vrot.slane %v698, %v706
    %v708 = vadd.f32 %v703, %v707
    %v709 = vmax.f32 %v708, 0.0
    %s710 = sshll.u32 %s182, 4
    %711 = dma.done %s123, %s710
    %v712 = vld [vmem:[%s122] sm:$0xff]
    %v713 = vld [vmem:[%s122 + $0x8] sm:$0xff]
    %v714 = vld [vmem:[%s122 + $0x10] sm:$0xff]
    %v715 = vld [vmem:[%s122 + $0x18] sm:$0xff]
    %v716 = vld [vmem:[%s122 + $0x20] sm:$0xff]
    %v717 = vld [vmem:[%s122 + $0x28] sm:$0xff]
    %v718 = vld [vmem:[%s122 + $0x30] sm:$0xff]
    %v719 = vld [vmem:[%s122 + $0x38] sm:$0xff]
    %v720 = vpack.c.bf16 %v709, %v709
    %721 = vmatprep.subr.bf16.mxu0 0
    %722 = vmatpush1.bf16.msra.mxu0 %v712
    %723 = vmatprep.subr.bf16.mxu0 0
    %724 = vmatpush1.bf16.msra.mxu0 %v713
    %725 = vmatprep.subr.bf16.mxu0 0
    %726 = vmatpush1.bf16.msra.mxu0 %v714
    %727 = vmatprep.subr.bf16.mxu0 0
    %728 = vmatpush1.bf16.msra.mxu0 %v715
    %729 = vmatprep.subr.bf16.mxu0 0
    %730 = vmatpush1.bf16.msra.mxu0 %v716
    %731 = vmatprep.subr.bf16.mxu0 0
    %732 = vmatpush1.bf16.msra.mxu0 %v717
    %733 = vmatprep.subr.bf16.mxu0 0
    %734 = vmatpush1.bf16.msra.mxu0 %v718
    %735 = vmatprep.subr.bf16.mxu0 0
    %736 = vmatpush1.bf16.msra.mxu0 %v719
    %737 = vmatprep.subr.bf16.mxu0 0
    %738 = vmatpush1.bf16.msra.mxu0 0
    %739 = vmatprep.subr.bf16.mxu0 0
    %740 = vmatpush1.bf16.msra.mxu0 0
    %741 = vmatprep.subr.bf16.mxu0 0
    %742 = vmatpush1.bf16.msra.mxu0 0
    %743 = vmatprep.subr.bf16.mxu0 0
    %744 = vmatpush1.bf16.msra.mxu0 0
    %745 = vmatprep.subr.bf16.mxu0 0
    %746 = vmatpush1.bf16.msra.mxu0 0
    %747 = vmatprep.subr.bf16.mxu0 0
    %748 = vmatpush1.bf16.msra.mxu0 0
    %749 = vmatprep.subr.bf16.mxu0 0
    %750 = vmatpush1.bf16.msra.mxu0 0
    %751 = vmatprep.subr.bf16.mxu0 0
    %752 = vmatpush1.bf16.msra.mxu0 0
    %753 = vmatprep.mubr.bf16.mxu0 0
    %754 = vmatmul.mubr.bf16.gmra.mrb[0].mxu0 %v720
    %v755 = vpop.f32.mrb[0].mxu0
    %v756 = vadd.f32 0.0, %v755
    %v757 = vpop.f32.mrb[0].mxu0
    %v758 = vpop.f32.mrb[0].mxu0
    %v759 = vpop.f32.mrb[0].mxu0
    %760 = vdwg.mxu0
    %v761 = vrot.slane %v756, 4
    %v762 = vadd.f32 %v756, %v761
    %v763 = vrot.slane %v762, 2
    %v764 = vadd.f32 %v762, %v763
    %v765 = vrot.slane %v764, 1
    %v766 = vadd.f32 %v764, %v765
    %v767 = vmul.f32 %v766, %v238
    %v768 = vmul.f32 %v756, %v756
    %v769 = vrot.slane %v768, 4
    %v770 = vadd.f32 %v768, %v769
    %v771 = vrot.slane %v770, 2
    %v772 = vadd.f32 %v770, %v771
    %v773 = vrot.slane %v772, 1
    %v774 = vadd.f32 %v772, %v773
    %v775 = vmul.f32 %v774, %v238
    %v776 = vmul.f32 %v767, %v767
    %v777 = vsub.f32 %v775, %v776
    %v778 = vmax.f32 %v777, 0.0
    %v779 = vadd.f32 %v778, 1e-05
    %v780 = vrsqrt.pop %v779
    %v781 = vmul.f32 %v177, %v780
    %v782 = vmul.f32 %v767, %v781
    %v784 = vrot.slane %v782, 7
    %v786 = vsub.f32 %v178, %v784
    %v787 = vlaneseq
    %v788 = vshrl.u32 %v787, 7
    %v789 = vsub.s32 6, %v788
    %v790 = vrot.slane %v781, %v789
    %v791 = vmul.f32 %v756, %v790
    %v792 = vlaneseq
    %v793 = vshrl.u32 %v792, 7
    %v794 = vsub.s32 7, %v793
    %v795 = vrot.slane %v786, %v794
    %v796 = vadd.f32 %v791, %v795
    %v797 = vmax.f32 %v796, 0.0
    %s798 = sshll.u32 %s182, 4
    %799 = dma.done %s137, %s798
    %v800 = vld [vmem:[%s136] sm:$0xff]
    %v801 = vld [vmem:[%s136 + $0x8] sm:$0xff]
    %v802 = vld [vmem:[%s136 + $0x10] sm:$0xff]
    %v803 = vld [vmem:[%s136 + $0x18] sm:$0xff]
    %v804 = vld [vmem:[%s136 + $0x20] sm:$0xff]
    %v805 = vld [vmem:[%s136 + $0x28] sm:$0xff]
    %v806 = vld [vmem:[%s136 + $0x30] sm:$0xff]
    %v807 = vld [vmem:[%s136 + $0x38] sm:$0xff]
    %v808 = vpack.c.bf16 %v797, %v797
    %809 = vmatprep.subr.bf16.mxu0 0
    %810 = vmatpush1.bf16.msra.mxu0 %v800
    %811 = vmatprep.subr.bf16.mxu0 0
    %812 = vmatpush1.bf16.msra.mxu0 %v801
    %813 = vmatprep.subr.bf16.mxu0 0
    %814 = vmatpush1.bf16.msra.mxu0 %v802
    %815 = vmatprep.subr.bf16.mxu0 0
    %816 = vmatpush1.bf16.msra.mxu0 %v803
    %817 = vmatprep.subr.bf16.mxu0 0
    %818 = vmatpush1.bf16.msra.mxu0 %v804
    %819 = vmatprep.subr.bf16.mxu0 0
    %820 = vmatpush1.bf16.msra.mxu0 %v805
    %821 = vmatprep.subr.bf16.mxu0 0
    %822 = vmatpush1.bf16.msra.mxu0 %v806
    %823 = vmatprep.subr.bf16.mxu0 0
    %824 = vmatpush1.bf16.msra.mxu0 %v807
    %825 = vmatprep.subr.bf16.mxu0 0
    %826 = vmatpush1.bf16.msra.mxu0 0
    %827 = vmatprep.subr.bf16.mxu0 0
    %828 = vmatpush1.bf16.msra.mxu0 0
    %829 = vmatprep.subr.bf16.mxu0 0
    %830 = vmatpush1.bf16.msra.mxu0 0
    %831 = vmatprep.subr.bf16.mxu0 0
    %832 = vmatpush1.bf16.msra.mxu0 0
    %833 = vmatprep.subr.bf16.mxu0 0
    %834 = vmatpush1.bf16.msra.mxu0 0
    %835 = vmatprep.subr.bf16.mxu0 0
    %836 = vmatpush1.bf16.msra.mxu0 0
    %837 = vmatprep.subr.bf16.mxu0 0
    %838 = vmatpush1.bf16.msra.mxu0 0
    %839 = vmatprep.subr.bf16.mxu0 0
    %840 = vmatpush1.bf16.msra.mxu0 0
    %841 = vmatprep.mubr.bf16.mxu0 0
    %842 = vmatmul.mubr.bf16.gmra.mrb[0].mxu0 %v808
    %v843 = vpop.f32.mrb[0].mxu0
    %v844 = vadd.f32 0.0, %v843
    %v845 = vpop.f32.mrb[0].mxu0
    %v846 = vpop.f32.mrb[0].mxu0
    %v847 = vpop.f32.mrb[0].mxu0
    %848 = vdwg.mxu0
    %v849 = vrot.slane %v844, 4
    %v850 = vadd.f32 %v844, %v849
    %v851 = vrot.slane %v850, 2
    %v852 = vadd.f32 %v850, %v851
    %v853 = vrot.slane %v852, 1
    %v854 = vadd.f32 %v852, %v853
    %v855 = vmul.f32 %v854, %v238
    %v856 = vmul.f32 %v844, %v844
    %v857 = vrot.slane %v856, 4
    %v858 = vadd.f32 %v856, %v857
    %v859 = vrot.slane %v858, 2
    %v860 = vadd.f32 %v858, %v859
    %v861 = vrot.slane %v860, 1
    %v862 = vadd.f32 %v860, %v861
    %v863 = vmul.f32 %v862, %v238
    %v864 = vmul.f32 %v855, %v855
    %v865 = vsub.f32 %v863, %v864
    %v866 = vmax.f32 %v865, 0.0
    %v867 = vadd.f32 %v866, 1e-05
    %v868 = vrsqrt.pop %v867
    %v869 = vmul.f32 %v177, %v868
    %v870 = vmul.f32 %v855, %v869
    %v872 = vrot.slane %v870, 7
    %v874 = vsub.f32 %v179, %v872
    %v875 = vlaneseq
    %v876 = vshrl.u32 %v875, 7
    %v877 = vsub.s32 7, %v876
    %v878 = vrot.slane %v869, %v877
    %v879 = vmul.f32 %v844, %v878
    %v880 = vlaneseq
    %v881 = vshrl.u32 %v880, 7
    %v882 = vsub.s32 0, %v881
    %v883 = vrot.slane %v874, %v882
    %v884 = vadd.f32 %v879, %v883
    %v885 = vmax.f32 %v884, 0.0
    %s886 = sshll.u32 %s182, 4
    %887 = dma.done %s151, %s886
    %v888 = vld [vmem:[%s150] sm:$0xff]
    %v889 = vld [vmem:[%s150 + $0x8] sm:$0xff]
    %v890 = vld [vmem:[%s150 + $0x10] sm:$0xff]
    %v891 = vld [vmem:[%s150 + $0x18] sm:$0xff]
    %v892 = vld [vmem:[%s150 + $0x20] sm:$0xff]
    %v893 = vld [vmem:[%s150 + $0x28] sm:$0xff]
    %v894 = vld [vmem:[%s150 + $0x30] sm:$0xff]
    %v895 = vld [vmem:[%s150 + $0x38] sm:$0xff]
    %v896 = vpack.c.bf16 %v885, %v885
    %897 = vmatprep.subr.bf16.mxu0 0
    %898 = vmatpush1.bf16.msra.mxu0 %v888
    %899 = vmatprep.subr.bf16.mxu0 0
    %900 = vmatpush1.bf16.msra.mxu0 %v889
    %901 = vmatprep.subr.bf16.mxu0 0
    %902 = vmatpush1.bf16.msra.mxu0 %v890
    %903 = vmatprep.subr.bf16.mxu0 0
    %904 = vmatpush1.bf16.msra.mxu0 %v891
    %905 = vmatprep.subr.bf16.mxu0 0
    %906 = vmatpush1.bf16.msra.mxu0 %v892
    %907 = vmatprep.subr.bf16.mxu0 0
    %908 = vmatpush1.bf16.msra.mxu0 %v893
    %909 = vmatprep.subr.bf16.mxu0 0
    %910 = vmatpush1.bf16.msra.mxu0 %v894
    %911 = vmatprep.subr.bf16.mxu0 0
    %912 = vmatpush1.bf16.msra.mxu0 %v895
    %913 = vmatprep.subr.bf16.mxu0 0
    %914 = vmatpush1.bf16.msra.mxu0 0
    %915 = vmatprep.subr.bf16.mxu0 0
    %916 = vmatpush1.bf16.msra.mxu0 0
    %917 = vmatprep.subr.bf16.mxu0 0
    %918 = vmatpush1.bf16.msra.mxu0 0
    %919 = vmatprep.subr.bf16.mxu0 0
    %920 = vmatpush1.bf16.msra.mxu0 0
    %921 = vmatprep.subr.bf16.mxu0 0
    %922 = vmatpush1.bf16.msra.mxu0 0
    %923 = vmatprep.subr.bf16.mxu0 0
    %924 = vmatpush1.bf16.msra.mxu0 0
    %925 = vmatprep.subr.bf16.mxu0 0
    %926 = vmatpush1.bf16.msra.mxu0 0
    %927 = vmatprep.subr.bf16.mxu0 0
    %928 = vmatpush1.bf16.msra.mxu0 0
    %929 = vmatprep.mubr.bf16.mxu0 0
    %930 = vmatmul.mubr.bf16.gmra.mrb[0].mxu0 %v896
    %v931 = vpop.f32.mrb[0].mxu0
    %v932 = vadd.f32 0.0, %v931
    %v933 = vpop.f32.mrb[0].mxu0
    %v934 = vpop.f32.mrb[0].mxu0
    %v935 = vpop.f32.mrb[0].mxu0
    %936 = vdwg.mxu0
    %v937 = vrot.slane %v932, 4
    %v938 = vadd.f32 %v932, %v937
    %v939 = vrot.slane %v938, 2
    %v940 = vadd.f32 %v938, %v939
    %v941 = vrot.slane %v940, 1
    %v942 = vadd.f32 %v940, %v941
    %v943 = vmul.f32 %v942, %v238
    %v944 = vmul.f32 %v932, %v932
    %v945 = vrot.slane %v944, 4
    %v946 = vadd.f32 %v944, %v945
    %v947 = vrot.slane %v946, 2
    %v948 = vadd.f32 %v946, %v947
    %v949 = vrot.slane %v948, 1
    %v950 = vadd.f32 %v948, %v949
    %v951 = vmul.f32 %v950, %v238
    %v952 = vmul.f32 %v943, %v943
    %v953 = vsub.f32 %v951, %v952
    %v954 = vmax.f32 %v953, 0.0
    %v955 = vadd.f32 %v954, 1e-05
    %v956 = vrsqrt.pop %v955
    %v957 = vmul.f32 %v178, %v956
    %v958 = vmul.f32 %v943, %v957
    %v960 = vrot.slane %v958, 7
    %v962 = vsub.f32 %v179, %v960
    %v963 = vlaneseq
    %v964 = vshrl.u32 %v963, 7
    %v965 = vsub.s32 0, %v964
    %v966 = vrot.slane %v957, %v965
    %v967 = vmul.f32 %v932, %v966
    %v968 = vlaneseq
    %v969 = vshrl.u32 %v968, 7
    %v970 = vsub.s32 1, %v969
    %v971 = vrot.slane %v962, %v970
    %v972 = vadd.f32 %v967, %v971
    %v973 = vmax.f32 %v972, 0.0
    %s974 = sshll.u32 %s182, 4
    %975 = dma.done %s165, %s974
    %v976 = vpack.c.bf16 %v973, %v973
    %v977 = vld [vmem:[%s164] sm:$0xff]
    %v978 = vld [vmem:[%s164 + $0x8] sm:$0xff]
    %v979 = vld [vmem:[%s164 + $0x10] sm:$0xff]
    %v980 = vld [vmem:[%s164 + $0x18] sm:$0xff]
    %v981 = vld [vmem:[%s164 + $0x20] sm:$0xff]
    %v982 = vld [vmem:[%s164 + $0x28] sm:$0xff]
    %v983 = vld [vmem:[%s164 + $0x30] sm:$0xff]
    %v984 = vld [vmem:[%s164 + $0x38] sm:$0xff]
    %v985 = vlaneseq
    %v986 = vshrl.u32 %v985, 7
    %v987 = vsub.s32 2, %v986
    %v988 = vrot.slane %v179, %v987
    %989 = vmatprep.subr.bf16.mxu0 0
    %990 = vmatpush1.bf16.msra.mxu0 %v977
    %991 = vmatprep.subr.bf16.mxu0 0
    %992 = vmatpush1.bf16.msra.mxu0 %v978
    %993 = vmatprep.subr.bf16.mxu0 0
    %994 = vmatpush1.bf16.msra.mxu0 %v979
    %995 = vmatprep.subr.bf16.mxu0 0
    %996 = vmatpush1.bf16.msra.mxu0 %v980
    %997 = vmatprep.subr.bf16.mxu0 0
    %998 = vmatpush1.bf16.msra.mxu0 %v981
    %999 = vmatprep.subr.bf16.mxu0 0
    %1000 = vmatpush1.bf16.msra.mxu0 %v982
    %1001 = vmatprep.subr.bf16.mxu0 0
    %1002 = vmatpush1.bf16.msra.mxu0 %v983
    %1003 = vmatprep.subr.bf16.mxu0 0
    %1004 = vmatpush1.bf16.msra.mxu0 %v984
    %1005 = vmatprep.subr.bf16.mxu0 0
    %1006 = vmatpush1.bf16.msra.mxu0 0
    %1007 = vmatprep.subr.bf16.mxu0 0
    %1008 = vmatpush1.bf16.msra.mxu0 0
    %1009 = vmatprep.subr.bf16.mxu0 0
    %1010 = vmatpush1.bf16.msra.mxu0 0
    %1011 = vmatprep.subr.bf16.mxu0 0
    %1012 = vmatpush1.bf16.msra.mxu0 0
    %1013 = vmatprep.subr.bf16.mxu0 0
    %1014 = vmatpush1.bf16.msra.mxu0 0
    %1015 = vmatprep.subr.bf16.mxu0 0
    %1016 = vmatpush1.bf16.msra.mxu0 0
    %1017 = vmatprep.subr.bf16.mxu0 0
    %1018 = vmatpush1.bf16.msra.mxu0 0
    %1019 = vmatprep.subr.bf16.mxu0 0
    %1020 = vmatpush1.bf16.msra.mxu0 0
    %1021 = vmatprep.mubr.bf16.mxu0 0
    %1022 = vmatmul.mubr.bf16.gmra.mrb[0].mxu0 %v976
    %v1023 = vpop.f32.mrb[0].mxu0
    %v1024 = vadd.f32 %v988, %v1023
    %v1025 = vpop.f32.mrb[0].mxu0
    %v1026 = vpop.f32.mrb[0].mxu0
    %v1027 = vpop.f32.mrb[0].mxu0
    %1028 = vdwg.mxu0
    %1029 = vst [vmem:[#allocation9] sm:$0xff] %v1024
    // Predicated region
    $region58: #{baseline_forward.1} parent=1 // pred_check
      _
    $region59: #{baseline_forward.1} parent=1 // pred_check_branch
      %1031 = sbr.rel (0) target = $region61
    $region60: #{baseline_forward.1} parent=1 // pred_region
      %s1033 = ssub.s32 128, 128
      %1034 = vsyncadd [#allocation6], %s1033
      %s1036 = sshll.u32 [#allocation9], 4
      %s1037 = int_to_ptr.vmem [resolvable:$true] %s1036
      %1039 = dma.vmem_to_hbm [thread:$0]  %s1037, 128, %s3, [#allocation6]
    $region61: #{baseline_forward.1} parent=1 // pred_fallthru
      _
    // Predicated region
    $region62: #{baseline_forward.1} parent=1 // pred_check
      _
    $region63: #{baseline_forward.1} parent=1 // pred_check_branch
      %1041 = sbr.rel (0) target = $region65
    $region64: #{baseline_forward.1} parent=1 // pred_region
      %1042 = dma.done [#allocation6], 128
    $region65: #{baseline_forward.1} parent=1 // pred_fallthru
      _
    %1043 = vsyncpa [#allocation5], 1
    %1044 = vsyncpa [#allocation8], 1
    %1045 = vsyncpa [#allocation6], 1
  %1046 = vsyncmov [#allocation3]
  %s1047 = vpop.sfrf %1046
  %p1048 = scmp.eq.s32.totalorder %s1047, 0
  %p1049 = pneg %p1048
  %1051 = shalt.err (%p1049)
  %s1052 = scalar_lea.sflag [#allocation3], 1
  %1053 = vsyncmov %s1052
  %s1054 = vpop.sfrf %1053
  %p1055 = scmp.eq.s32.totalorder %s1054, 0
  %p1056 = pneg %p1055
  %1058 = shalt.err (%p1056)
  %s1059 = scalar_lea.sflag [#allocation3], 2
  %1060 = vsyncmov %s1059
  %s1061 = vpop.sfrf %1060
  %p1062 = scmp.eq.s32.totalorder %s1061, 0
  %p1063 = pneg %p1062
  %1065 = shalt.err (%p1063)
  %s1066 = scalar_lea.sflag [#allocation3], 3
  %1067 = vsyncmov %s1066
  %s1068 = vpop.sfrf %1067
  %p1069 = scmp.eq.s32.totalorder %s1068, 0
  %p1070 = pneg %p1069
  %1072 = shalt.err (%p1070)
  %s1073 = scalar_lea.sflag [#allocation3], 4
  %1074 = vsyncmov %s1073
  %s1075 = vpop.sfrf %1074
  %p1076 = scmp.eq.s32.totalorder %s1075, 0
  %p1077 = pneg %p1076
  %1079 = shalt.err (%p1077)
  %s1080 = scalar_lea.sflag [#allocation3], 5
  %1081 = vsyncmov %s1080
  %s1082 = vpop.sfrf %1081
  %p1083 = scmp.eq.s32.totalorder %s1082, 0
  %p1084 = pneg %p1083
  %1086 = shalt.err (%p1084)
  %s1087 = scalar_lea.sflag [#allocation3], 6
  %1088 = vsyncmov %s1087
  %s1089 = vpop.sfrf %1088
  %p1090 = scmp.eq.s32.totalorder %s1089, 0
  %p1091 = pneg %p1090
  %1093 = shalt.err (%p1091)
  %s1094 = scalar_lea.sflag [#allocation3], 7
  %1095 = vsyncmov %s1094
  %s1096 = vpop.sfrf %1095
  %p1097 = scmp.eq.s32.totalorder %s1096, 0
  %p1098 = pneg %p1097
  %1100 = shalt.err (%p1098)
  %s1101 = scalar_lea.sflag [#allocation3], 8
  %1102 = vsyncmov %s1101
  %s1103 = vpop.sfrf %1102
  %p1104 = scmp.eq.s32.totalorder %s1103, 0
  %p1105 = pneg %p1104
  %1107 = shalt.err (%p1105)
  %s1108 = scalar_lea.sflag [#allocation3], 9
  %1109 = vsyncmov %s1108
  %s1110 = vpop.sfrf %1109
  %p1111 = scmp.eq.s32.totalorder %s1110, 0
  %p1112 = pneg %p1111
  %1114 = shalt.err (%p1112)

</llo_original>
